<compile_context>
chip_gen: v7x
topology: tpu7x:2x2x1
jax: 0.10.0
libtpu: 0.0.40
codegen_flags: <defaults>
</compile_context>

<pallas_src>
import functools
import math

import jax
import jax.numpy as jnp
from jax import lax
from jax.experimental import pallas as pl
from jax.experimental.pallas import tpu as pltpu


# ------------------------------ fused kernel ------------------------------- #

def _mha_kernel(xq_ref, xk_ref, xv_ref, res_ref,
                wq_ref, wk_ref, wv_ref, wfc_ref,
                out_ref, scores_ref,
                *, n_heads, d_k, d_v, inv_sqrt_dk):
    # One grid step = one (batch, num_of_d) group; all heads processed here.
    xq = xq_ref[0]          # [S, d_model]  (also the residual)
    xk = xk_ref[0]          # [S, d_model]
    xv = xv_ref[0]          # [S, d_model]
    r = res_ref[0]          # [H, S, S]
    wfc = wfc_ref[...]      # [d_model, H*d_v]   (PyTorch [out, in] layout)

    # PyTorch nn.Linear (bias=False): x @ W^T, W stored [out, in].
    # Fold the transpose into the contraction: contract dim 1 of both operands.
    dn = (((1,), (1,)), ((), ()))
    Q = lax.dot_general(xq, wq_ref[...], dn, preferred_element_type=jnp.float32)  # [S, H*d_k]
    K = lax.dot_general(xk, wk_ref[...], dn, preferred_element_type=jnp.float32)  # [S, H*d_k]
    V = lax.dot_general(xv, wv_ref[...], dn, preferred_element_type=jnp.float32)  # [S, H*d_v]

    # Accumulate fc(context) per head directly into the residual stream; the
    # concatenated context tensor is never materialized.
    y = xq
    for h in range(n_heads):
        qh = Q[:, h * d_k:(h + 1) * d_k]          # [S, d_k]
        kh = K[:, h * d_k:(h + 1) * d_k]          # [S, d_k]
        vh = V[:, h * d_v:(h + 1) * d_v]          # [S, d_v]

        # scores = Q_h @ K_h^T / sqrt(d_k) + res_att_h
        s = lax.dot_general(qh, kh, dn, preferred_element_type=jnp.float32)  # [Sq, Sk]
        s = s * inv_sqrt_dk + r[h]
        scores_ref[0, h] = s                      # returned pre-softmax (res_attn)

        # DSTAGNN quirk: F.softmax(dim=3) on [B,D,H,Sq,Sk] == softmax over the
        # query axis, i.e. axis 0 of this [Sq, Sk] tile.
        m = jnp.max(s, axis=0, keepdims=True)
        e = jnp.exp(s - m)
        p = e * pl.reciprocal(jnp.sum(e, axis=0, keepdims=True), approx=True)

        ctx_h = jnp.dot(p, vh, preferred_element_type=jnp.float32)           # [S, d_v]
        # fc slice for this head: W_fc[:, h*d_v:(h+1)*d_v] is [d_model, d_v]
        y = y + lax.dot_general(ctx_h, wfc[:, h * d_v:(h + 1) * d_v], dn,
                                preferred_element_type=jnp.float32)          # [S, d_model]

    # LayerNorm(d_model), default init: gamma=1, beta=0, eps=1e-5, biased var.
    mean = jnp.mean(y, axis=-1, keepdims=True)
    cen = y - mean
    var = jnp.mean(cen * cen, axis=-1, keepdims=True)
    out_ref[0] = cen * lax.rsqrt(var + 1e-5)


# ------------------------------ module wrapper ------------------------------ #

def multi_head_attention(params, input_Q, input_K, input_V, attn_mask, res_att,
                         *, n_heads, d_k, d_v):
    # TODO(synk): attn_mask masked_fill_ path not implemented (DSTAGNN calls this
    # module with attn_mask=None; the PyTorch broadcast there is shape-dependent).
    assert attn_mask is None

    B, D, S, d_model = input_Q.shape
    G = B * D
    hk, hv = n_heads * d_k, n_heads * d_v

    xq = input_Q.reshape(G, S, d_model)
    xk = input_K.reshape(G, S, d_model)
    xv = input_V.reshape(G, S, d_model)
    rf = res_att.reshape(G, n_heads, S, S)

    kernel = functools.partial(_mha_kernel, n_heads=n_heads, d_k=d_k, d_v=d_v,
                               inv_sqrt_dk=1.0 / math.sqrt(d_k))

    out, scores = pl.pallas_call(
        kernel,
        out_shape=(jax.ShapeDtypeStruct((G, S, d_model), jnp.float32),
                   jax.ShapeDtypeStruct((G, n_heads, S, S), jnp.float32)),
        grid=(G,),
        in_specs=[
            pl.BlockSpec((1, S, d_model), lambda g: (g, 0, 0)),
            pl.BlockSpec((1, S, d_model), lambda g: (g, 0, 0)),
            pl.BlockSpec((1, S, d_model), lambda g: (g, 0, 0)),
            pl.BlockSpec((1, n_heads, S, S), lambda g: (g, 0, 0, 0)),
            # Weights: full blocks, same index every step -> fetched once, reused.
            pl.BlockSpec((hk, d_model), lambda g: (0, 0)),
            pl.BlockSpec((hk, d_model), lambda g: (0, 0)),
            pl.BlockSpec((hv, d_model), lambda g: (0, 0)),
            pl.BlockSpec((d_model, hv), lambda g: (0, 0)),
        ],
        out_specs=(pl.BlockSpec((1, S, d_model), lambda g: (g, 0, 0)),
                   pl.BlockSpec((1, n_heads, S, S), lambda g: (g, 0, 0, 0))),
        compiler_params=pltpu.CompilerParams(
            dimension_semantics=("parallel",)),
    )(xq, xk, xv, rf, params["W_Q"], params["W_K"], params["W_V"], params["fc"])

    return (out.reshape(B, D, S, d_model),
            scores.reshape(B, D, n_heads, S, S))


# --------------------------- pure-JAX reference ----------------------------- #

def reference(params, iq, ik, iv, res_att, *, n_heads, d_k, d_v):
    B, D, S, dm = iq.shape
    Q = (iq @ params["W_Q"].T).reshape(B, D, S, n_heads, d_k).transpose(0, 1, 3, 2, 4)
    K = (ik @ params["W_K"].T).reshape(B, D, S, n_heads, d_k).transpose(0, 1, 3, 2, 4)
    V = (iv @ params["W_V"].T).reshape(B, D, S, n_heads, d_v).transpose(0, 1, 3, 2, 4)
    scores = jnp.einsum("bdhqc,bdhmc->bdhqm", Q, K) / math.sqrt(d_k) + res_att
    attn = jax.nn.softmax(scores, axis=3)          # query-axis softmax (dim=3)
    ctx = jnp.einsum("bdhqm,bdhmv->bdhqv", attn, V)
    ctx = ctx.transpose(0, 1, 3, 2, 4).reshape(B, D, S, n_heads * d_v)
    out = ctx @ params["fc"].T + iq
    mean = out.mean(-1, keepdims=True)
    var = ((out - mean) ** 2).mean(-1, keepdims=True)
    return (out - mean) / jnp.sqrt(var + 1e-5), scores


# ---------------------------------- main ------------------------------------ #

if __name__ == "__main__":
    B, num_of_d, S = 2, 3, 8
    d_model, n_heads, d_k, d_v = 32, 4, 8, 8

    key = jax.random.PRNGKey(0)
    k_iq, k_ik, k_iv, k_res, k_wq, k_wk, k_wv, k_fc = jax.random.split(key, 8)

    input_Q = jax.random.normal(k_iq, (B, num_of_d, S, d_model), jnp.float32)
    input_K = jax.random.normal(k_ik, (B, num_of_d, S, d_model), jnp.float32)
    input_V = jax.random.normal(k_iv, (B, num_of_d, S, d_model), jnp.float32)
    res_att = jax.random.normal(k_res, (B, num_of_d, n_heads, S, S), jnp.float32) * 0.1

    params = {
        "W_Q": jax.random.normal(k_wq, (n_heads * d_k, d_model), jnp.float32) * 0.1,
        "W_K": jax.random.normal(k_wk, (n_heads * d_k, d_model), jnp.float32) * 0.1,
        "W_V": jax.random.normal(k_wv, (n_heads * d_v, d_model), jnp.float32) * 0.1,
        "fc":  jax.random.normal(k_fc, (d_model, n_heads * d_v), jnp.float32) * 0.1,
    }

    out, res_attn = multi_head_attention(
        params, input_Q, input_K, input_V, None, res_att,
        n_heads=n_heads, d_k=d_k, d_v=d_v)
    jax.block_until_ready((out, res_attn))

    ref_out, ref_scores = reference(
        params, input_Q, input_K, input_V, res_att,
        n_heads=n_heads, d_k=d_k, d_v=d_v)

    assert out.shape == (B, num_of_d, S, d_model)
    assert res_attn.shape == (B, num_of_d, n_heads, S, S)
    assert jnp.allclose(out, ref_out, atol=2e-3, rtol=2e-3)
    assert jnp.allclose(res_attn, ref_scores, atol=2e-3, rtol=2e-3)

    print("KERNEL_OK")
</pallas_src>

<mosaic_0001>
module attributes {stable_mosaic.version = 11 : i64} {
  func.func @_mha_kernel(%arg0: i32, %arg1: memref<1x8x32xf32, #tpu.memory_space<vmem>>, %arg2: memref<1x8x32xf32, #tpu.memory_space<vmem>>, %arg3: memref<1x8x32xf32, #tpu.memory_space<vmem>>, %arg4: memref<1x4x8x8xf32, #tpu.memory_space<vmem>>, %arg5: memref<32x32xf32, #tpu.memory_space<vmem>>, %arg6: memref<32x32xf32, #tpu.memory_space<vmem>>, %arg7: memref<32x32xf32, #tpu.memory_space<vmem>>, %arg8: memref<32x32xf32, #tpu.memory_space<vmem>>, %arg9: memref<1x8x32xf32, #tpu.memory_space<vmem>>, %arg10: memref<1x4x8x8xf32, #tpu.memory_space<vmem>>) attributes {dimension_semantics = [#tpu.dimension_semantics<parallel>], iteration_bounds = array<i64: 6>, scalar_prefetch = 0 : i64, scratch_operands = 0 : i64, tpu.core_type = #tpu.core_type<tc>, window_params = [{transform_indices = @transform_0, window_bounds = array<i64: 1, 8, 32>}, {transform_indices = @transform_1, window_bounds = array<i64: 1, 8, 32>}, {transform_indices = @transform_2, window_bounds = array<i64: 1, 8, 32>}, {transform_indices = @transform_3, window_bounds = array<i64: 1, 4, 8, 8>}, {pipeline_mode = #tpu.pipeline_mode<synchronous>, transform_indices = @transform_4, window_bounds = array<i64: 32, 32>}, {pipeline_mode = #tpu.pipeline_mode<synchronous>, transform_indices = @transform_5, window_bounds = array<i64: 32, 32>}, {pipeline_mode = #tpu.pipeline_mode<synchronous>, transform_indices = @transform_6, window_bounds = array<i64: 32, 32>}, {pipeline_mode = #tpu.pipeline_mode<synchronous>, transform_indices = @transform_7, window_bounds = array<i64: 32, 32>}, {transform_indices = @transform_8, window_bounds = array<i64: 1, 8, 32>}, {transform_indices = @transform_9, window_bounds = array<i64: 1, 4, 8, 8>}]} {
    %c0 = arith.constant 0 : index
    %c0_0 = arith.constant 0 : index
    %c0_1 = arith.constant 0 : index
    %0 = vector.load %arg1[%c0, %c0_0, %c0_1] : memref<1x8x32xf32, #tpu.memory_space<vmem>>, vector<1x8x32xf32>
    %1 = vector.shape_cast %0 : vector<1x8x32xf32> to vector<8x32xf32>
    %c0_2 = arith.constant 0 : index
    %c0_3 = arith.constant 0 : index
    %c0_4 = arith.constant 0 : index
    %2 = vector.load %arg2[%c0_2, %c0_3, %c0_4] : memref<1x8x32xf32, #tpu.memory_space<vmem>>, vector<1x8x32xf32>
    %3 = vector.shape_cast %2 : vector<1x8x32xf32> to vector<8x32xf32>
    %c0_5 = arith.constant 0 : index
    %c0_6 = arith.constant 0 : index
    %c0_7 = arith.constant 0 : index
    %4 = vector.load %arg3[%c0_5, %c0_6, %c0_7] : memref<1x8x32xf32, #tpu.memory_space<vmem>>, vector<1x8x32xf32>
    %5 = vector.shape_cast %4 : vector<1x8x32xf32> to vector<8x32xf32>
    %c0_8 = arith.constant 0 : index
    %c0_9 = arith.constant 0 : index
    %c0_10 = arith.constant 0 : index
    %c0_11 = arith.constant 0 : index
    %6 = vector.load %arg4[%c0_8, %c0_9, %c0_10, %c0_11] : memref<1x4x8x8xf32, #tpu.memory_space<vmem>>, vector<1x4x8x8xf32>
    %7 = vector.shape_cast %6 : vector<1x4x8x8xf32> to vector<4x8x8xf32>
    %c0_12 = arith.constant 0 : index
    %c0_13 = arith.constant 0 : index
    %8 = vector.load %arg8[%c0_12, %c0_13] : memref<32x32xf32, #tpu.memory_space<vmem>>, vector<32x32xf32>
    %c0_14 = arith.constant 0 : index
    %c0_15 = arith.constant 0 : index
    %9 = vector.load %arg5[%c0_14, %c0_15] : memref<32x32xf32, #tpu.memory_space<vmem>>, vector<32x32xf32>
    %cst = arith.constant dense<0.000000e+00> : vector<8x32xf32>
    %10 = tpu.matmul %1, %9, %cst {dimension_numbers = #tpu.dot_dimension_numbers<[1], [1], [0], [0], [0, 0, 1, 0], [], []>} : vector<8x32xf32>, vector<32x32xf32>, vector<8x32xf32> -> vector<8x32xf32>
    %c0_16 = arith.constant 0 : index
    %c0_17 = arith.constant 0 : index
    %11 = vector.load %arg6[%c0_16, %c0_17] : memref<32x32xf32, #tpu.memory_space<vmem>>, vector<32x32xf32>
    %cst_18 = arith.constant dense<0.000000e+00> : vector<8x32xf32>
    %12 = tpu.matmul %3, %11, %cst_18 {dimension_numbers = #tpu.dot_dimension_numbers<[1], [1], [0], [0], [0, 0, 1, 0], [], []>} : vector<8x32xf32>, vector<32x32xf32>, vector<8x32xf32> -> vector<8x32xf32>
    %c0_19 = arith.constant 0 : index
    %c0_20 = arith.constant 0 : index
    %13 = vector.load %arg7[%c0_19, %c0_20] : memref<32x32xf32, #tpu.memory_space<vmem>>, vector<32x32xf32>
    %cst_21 = arith.constant dense<0.000000e+00> : vector<8x32xf32>
    %14 = tpu.matmul %5, %13, %cst_21 {dimension_numbers = #tpu.dot_dimension_numbers<[1], [1], [0], [0], [0, 0, 1, 0], [], []>} : vector<8x32xf32>, vector<32x32xf32>, vector<8x32xf32> -> vector<8x32xf32>
    %15 = vector.extract_strided_slice %10 {offsets = [0, 0], sizes = [8, 8], strides = [1, 1]} : vector<8x32xf32> to vector<8x8xf32>
    %16 = vector.extract_strided_slice %12 {offsets = [0, 0], sizes = [8, 8], strides = [1, 1]} : vector<8x32xf32> to vector<8x8xf32>
    %17 = vector.extract_strided_slice %14 {offsets = [0, 0], sizes = [8, 8], strides = [1, 1]} : vector<8x32xf32> to vector<8x8xf32>
    %cst_22 = arith.constant dense<0.000000e+00> : vector<8x8xf32>
    %18 = tpu.matmul %15, %16, %cst_22 {dimension_numbers = #tpu.dot_dimension_numbers<[1], [1], [0], [0], [0, 0, 1, 0], [], []>} : vector<8x8xf32>, vector<8x8xf32>, vector<8x8xf32> -> vector<8x8xf32>
    %cst_23 = arith.constant 0.353553385 : f32
    %19 = vector.broadcast %cst_23 : f32 to vector<8x8xf32>
    %20 = arith.mulf %18, %19 : vector<8x8xf32>
    %21 = vector.extract_strided_slice %7 {offsets = [0, 0, 0], sizes = [1, 8, 8], strides = [1, 1, 1]} : vector<4x8x8xf32> to vector<1x8x8xf32>
    %22 = vector.shape_cast %21 : vector<1x8x8xf32> to vector<8x8xf32>
    %23 = arith.addf %20, %22 : vector<8x8xf32>
    %c0_24 = arith.constant 0 : index
    %c0_25 = arith.constant 0 : index
    %c0_26 = arith.constant 0 : index
    %c0_27 = arith.constant 0 : index
    %24 = vector.load %arg10[%c0_24, %c0_25, %c0_26, %c0_27] : memref<1x4x8x8xf32, #tpu.memory_space<vmem>>, vector<1x1x8x8xf32>
    %25 = vector.shape_cast %24 : vector<1x1x8x8xf32> to vector<8x8xf32>
    %26 = vector.shape_cast %23 : vector<8x8xf32> to vector<1x1x8x8xf32>
    tpu.vector_store %arg10[%c0_24, %c0_25, %c0_26, %c0_27], %26 {strides = array<i32>} : memref<1x4x8x8xf32, #tpu.memory_space<vmem>>, vector<1x1x8x8xf32>,
    %cst_28 = arith.constant dense<0xFF800000> : vector<8xf32>
    %27 = vector.multi_reduction <maximumf>, %23, %cst_28 [0] : vector<8x8xf32> to vector<8xf32>
    %28 = vector.shape_cast %27 : vector<8xf32> to vector<1x8xf32>
    %29 = vector.broadcast %28 : vector<1x8xf32> to vector<8x8xf32>
    %30 = arith.subf %23, %29 : vector<8x8xf32>
    %31 = math.exp %30 : vector<8x8xf32>
    %cst_29 = arith.constant dense<0.000000e+00> : vector<8xf32>
    %32 = vector.multi_reduction <add>, %31, %cst_29 [0] : vector<8x8xf32> to vector<8xf32>
    %33 = vector.shape_cast %32 : vector<8xf32> to vector<1x8xf32>
    %34 = tpu.reciprocal %33 {approx = true} : vector<1x8xf32> -> vector<1x8xf32>
    %35 = vector.broadcast %34 : vector<1x8xf32> to vector<8x8xf32>
    %36 = arith.mulf %31, %35 : vector<8x8xf32>
    %cst_30 = arith.constant dense<0.000000e+00> : vector<8x8xf32>
    %37 = tpu.matmul %36, %17, %cst_30 {dimension_numbers = #tpu.dot_dimension_numbers<[1], [0], [0], [1], [0, 0, 1, 1], [], []>} : vector<8x8xf32>, vector<8x8xf32>, vector<8x8xf32> -> vector<8x8xf32>
    %38 = vector.extract_strided_slice %8 {offsets = [0, 0], sizes = [32, 8], strides = [1, 1]} : vector<32x32xf32> to vector<32x8xf32>
    %cst_31 = arith.constant dense<0.000000e+00> : vector<8x32xf32>
    %39 = tpu.matmul %37, %38, %cst_31 {dimension_numbers = #tpu.dot_dimension_numbers<[1], [1], [0], [0], [0, 0, 1, 0], [], []>} : vector<8x8xf32>, vector<32x8xf32>, vector<8x32xf32> -> vector<8x32xf32>
    %40 = arith.addf %1, %39 : vector<8x32xf32>
    %41 = vector.extract_strided_slice %10 {offsets = [0, 8], sizes = [8, 8], strides = [1, 1]} : vector<8x32xf32> to vector<8x8xf32>
    %42 = vector.extract_strided_slice %12 {offsets = [0, 8], sizes = [8, 8], strides = [1, 1]} : vector<8x32xf32> to vector<8x8xf32>
    %43 = vector.extract_strided_slice %14 {offsets = [0, 8], sizes = [8, 8], strides = [1, 1]} : vector<8x32xf32> to vector<8x8xf32>
    %cst_32 = arith.constant dense<0.000000e+00> : vector<8x8xf32>
    %44 = tpu.matmul %41, %42, %cst_32 {dimension_numbers = #tpu.dot_dimension_numbers<[1], [1], [0], [0], [0, 0, 1, 0], [], []>} : vector<8x8xf32>, vector<8x8xf32>, vector<8x8xf32> -> vector<8x8xf32>
    %cst_33 = arith.constant 0.353553385 : f32
    %45 = vector.broadcast %cst_33 : f32 to vector<8x8xf32>
    %46 = arith.mulf %44, %45 : vector<8x8xf32>
    %47 = vector.extract_strided_slice %7 {offsets = [1, 0, 0], sizes = [1, 8, 8], strides = [1, 1, 1]} : vector<4x8x8xf32> to vector<1x8x8xf32>
    %48 = vector.shape_cast %47 : vector<1x8x8xf32> to vector<8x8xf32>
    %49 = arith.addf %46, %48 : vector<8x8xf32>
    %c0_34 = arith.constant 0 : index
    %c1 = arith.constant 1 : index
    %c0_35 = arith.constant 0 : index
    %c0_36 = arith.constant 0 : index
    %50 = vector.load %arg10[%c0_34, %c1, %c0_35, %c0_36] : memref<1x4x8x8xf32, #tpu.memory_space<vmem>>, vector<1x1x8x8xf32>
    %51 = vector.shape_cast %50 : vector<1x1x8x8xf32> to vector<8x8xf32>
    %52 = vector.shape_cast %49 : vector<8x8xf32> to vector<1x1x8x8xf32>
    tpu.vector_store %arg10[%c0_34, %c1, %c0_35, %c0_36], %52 {strides = array<i32>} : memref<1x4x8x8xf32, #tpu.memory_space<vmem>>, vector<1x1x8x8xf32>,
    %cst_37 = arith.constant dense<0xFF800000> : vector<8xf32>
    %53 = vector.multi_reduction <maximumf>, %49, %cst_37 [0] : vector<8x8xf32> to vector<8xf32>
    %54 = vector.shape_cast %53 : vector<8xf32> to vector<1x8xf32>
    %55 = vector.broadcast %54 : vector<1x8xf32> to vector<8x8xf32>
    %56 = arith.subf %49, %55 : vector<8x8xf32>
    %57 = math.exp %56 : vector<8x8xf32>
    %cst_38 = arith.constant dense<0.000000e+00> : vector<8xf32>
    %58 = vector.multi_reduction <add>, %57, %cst_38 [0] : vector<8x8xf32> to vector<8xf32>
    %59 = vector.shape_cast %58 : vector<8xf32> to vector<1x8xf32>
    %60 = tpu.reciprocal %59 {approx = true} : vector<1x8xf32> -> vector<1x8xf32>
    %61 = vector.broadcast %60 : vector<1x8xf32> to vector<8x8xf32>
    %62 = arith.mulf %57, %61 : vector<8x8xf32>
    %cst_39 = arith.constant dense<0.000000e+00> : vector<8x8xf32>
    %63 = tpu.matmul %62, %43, %cst_39 {dimension_numbers = #tpu.dot_dimension_numbers<[1], [0], [0], [1], [0, 0, 1, 1], [], []>} : vector<8x8xf32>, vector<8x8xf32>, vector<8x8xf32> -> vector<8x8xf32>
    %64 = vector.extract_strided_slice %8 {offsets = [0, 8], sizes = [32, 8], strides = [1, 1]} : vector<32x32xf32> to vector<32x8xf32>
    %cst_40 = arith.constant dense<0.000000e+00> : vector<8x32xf32>
    %65 = tpu.matmul %63, %64, %cst_40 {dimension_numbers = #tpu.dot_dimension_numbers<[1], [1], [0], [0], [0, 0, 1, 0], [], []>} : vector<8x8xf32>, vector<32x8xf32>, vector<8x32xf32> -> vector<8x32xf32>
    %66 = arith.addf %40, %65 : vector<8x32xf32>
    %67 = vector.extract_strided_slice %10 {offsets = [0, 16], sizes = [8, 8], strides = [1, 1]} : vector<8x32xf32> to vector<8x8xf32>
    %68 = vector.extract_strided_slice %12 {offsets = [0, 16], sizes = [8, 8], strides = [1, 1]} : vector<8x32xf32> to vector<8x8xf32>
    %69 = vector.extract_strided_slice %14 {offsets = [0, 16], sizes = [8, 8], strides = [1, 1]} : vector<8x32xf32> to vector<8x8xf32>
    %cst_41 = arith.constant dense<0.000000e+00> : vector<8x8xf32>
    %70 = tpu.matmul %67, %68, %cst_41 {dimension_numbers = #tpu.dot_dimension_numbers<[1], [1], [0], [0], [0, 0, 1, 0], [], []>} : vector<8x8xf32>, vector<8x8xf32>, vector<8x8xf32> -> vector<8x8xf32>
    %cst_42 = arith.constant 0.353553385 : f32
    %71 = vector.broadcast %cst_42 : f32 to vector<8x8xf32>
    %72 = arith.mulf %70, %71 : vector<8x8xf32>
    %73 = vector.extract_strided_slice %7 {offsets = [2, 0, 0], sizes = [1, 8, 8], strides = [1, 1, 1]} : vector<4x8x8xf32> to vector<1x8x8xf32>
    %74 = vector.shape_cast %73 : vector<1x8x8xf32> to vector<8x8xf32>
    %75 = arith.addf %72, %74 : vector<8x8xf32>
    %c0_43 = arith.constant 0 : index
    %c2 = arith.constant 2 : index
    %c0_44 = arith.constant 0 : index
    %c0_45 = arith.constant 0 : index
    %76 = vector.load %arg10[%c0_43, %c2, %c0_44, %c0_45] : memref<1x4x8x8xf32, #tpu.memory_space<vmem>>, vector<1x1x8x8xf32>
    %77 = vector.shape_cast %76 : vector<1x1x8x8xf32> to vector<8x8xf32>
    %78 = vector.shape_cast %75 : vector<8x8xf32> to vector<1x1x8x8xf32>
    tpu.vector_store %arg10[%c0_43, %c2, %c0_44, %c0_45], %78 {strides = array<i32>} : memref<1x4x8x8xf32, #tpu.memory_space<vmem>>, vector<1x1x8x8xf32>,
    %cst_46 = arith.constant dense<0xFF800000> : vector<8xf32>
    %79 = vector.multi_reduction <maximumf>, %75, %cst_46 [0] : vector<8x8xf32> to vector<8xf32>
    %80 = vector.shape_cast %79 : vector<8xf32> to vector<1x8xf32>
    %81 = vector.broadcast %80 : vector<1x8xf32> to vector<8x8xf32>
    %82 = arith.subf %75, %81 : vector<8x8xf32>
    %83 = math.exp %82 : vector<8x8xf32>
    %cst_47 = arith.constant dense<0.000000e+00> : vector<8xf32>
    %84 = vector.multi_reduction <add>, %83, %cst_47 [0] : vector<8x8xf32> to vector<8xf32>
    %85 = vector.shape_cast %84 : vector<8xf32> to vector<1x8xf32>
    %86 = tpu.reciprocal %85 {approx = true} : vector<1x8xf32> -> vector<1x8xf32>
    %87 = vector.broadcast %86 : vector<1x8xf32> to vector<8x8xf32>
    %88 = arith.mulf %83, %87 : vector<8x8xf32>
    %cst_48 = arith.constant dense<0.000000e+00> : vector<8x8xf32>
    %89 = tpu.matmul %88, %69, %cst_48 {dimension_numbers = #tpu.dot_dimension_numbers<[1], [0], [0], [1], [0, 0, 1, 1], [], []>} : vector<8x8xf32>, vector<8x8xf32>, vector<8x8xf32> -> vector<8x8xf32>
    %90 = vector.extract_strided_slice %8 {offsets = [0, 16], sizes = [32, 8], strides = [1, 1]} : vector<32x32xf32> to vector<32x8xf32>
    %cst_49 = arith.constant dense<0.000000e+00> : vector<8x32xf32>
    %91 = tpu.matmul %89, %90, %cst_49 {dimension_numbers = #tpu.dot_dimension_numbers<[1], [1], [0], [0], [0, 0, 1, 0], [], []>} : vector<8x8xf32>, vector<32x8xf32>, vector<8x32xf32> -> vector<8x32xf32>
    %92 = arith.addf %66, %91 : vector<8x32xf32>
    %93 = vector.extract_strided_slice %10 {offsets = [0, 24], sizes = [8, 8], strides = [1, 1]} : vector<8x32xf32> to vector<8x8xf32>
    %94 = vector.extract_strided_slice %12 {offsets = [0, 24], sizes = [8, 8], strides = [1, 1]} : vector<8x32xf32> to vector<8x8xf32>
    %95 = vector.extract_strided_slice %14 {offsets = [0, 24], sizes = [8, 8], strides = [1, 1]} : vector<8x32xf32> to vector<8x8xf32>
    %cst_50 = arith.constant dense<0.000000e+00> : vector<8x8xf32>
    %96 = tpu.matmul %93, %94, %cst_50 {dimension_numbers = #tpu.dot_dimension_numbers<[1], [1], [0], [0], [0, 0, 1, 0], [], []>} : vector<8x8xf32>, vector<8x8xf32>, vector<8x8xf32> -> vector<8x8xf32>
    %cst_51 = arith.constant 0.353553385 : f32
    %97 = vector.broadcast %cst_51 : f32 to vector<8x8xf32>
    %98 = arith.mulf %96, %97 : vector<8x8xf32>
    %99 = vector.extract_strided_slice %7 {offsets = [3, 0, 0], sizes = [1, 8, 8], strides = [1, 1, 1]} : vector<4x8x8xf32> to vector<1x8x8xf32>
    %100 = vector.shape_cast %99 : vector<1x8x8xf32> to vector<8x8xf32>
    %101 = arith.addf %98, %100 : vector<8x8xf32>
    %c0_52 = arith.constant 0 : index
    %c3 = arith.constant 3 : index
    %c0_53 = arith.constant 0 : index
    %c0_54 = arith.constant 0 : index
    %102 = vector.load %arg10[%c0_52, %c3, %c0_53, %c0_54] : memref<1x4x8x8xf32, #tpu.memory_space<vmem>>, vector<1x1x8x8xf32>
    %103 = vector.shape_cast %102 : vector<1x1x8x8xf32> to vector<8x8xf32>
    %104 = vector.shape_cast %101 : vector<8x8xf32> to vector<1x1x8x8xf32>
    tpu.vector_store %arg10[%c0_52, %c3, %c0_53, %c0_54], %104 {strides = array<i32>} : memref<1x4x8x8xf32, #tpu.memory_space<vmem>>, vector<1x1x8x8xf32>,
    %cst_55 = arith.constant dense<0xFF800000> : vector<8xf32>
    %105 = vector.multi_reduction <maximumf>, %101, %cst_55 [0] : vector<8x8xf32> to vector<8xf32>
    %106 = vector.shape_cast %105 : vector<8xf32> to vector<1x8xf32>
    %107 = vector.broadcast %106 : vector<1x8xf32> to vector<8x8xf32>
    %108 = arith.subf %101, %107 : vector<8x8xf32>
    %109 = math.exp %108 : vector<8x8xf32>
    %cst_56 = arith.constant dense<0.000000e+00> : vector<8xf32>
    %110 = vector.multi_reduction <add>, %109, %cst_56 [0] : vector<8x8xf32> to vector<8xf32>
    %111 = vector.shape_cast %110 : vector<8xf32> to vector<1x8xf32>
    %112 = tpu.reciprocal %111 {approx = true} : vector<1x8xf32> -> vector<1x8xf32>
    %113 = vector.broadcast %112 : vector<1x8xf32> to vector<8x8xf32>
    %114 = arith.mulf %109, %113 : vector<8x8xf32>
    %cst_57 = arith.constant dense<0.000000e+00> : vector<8x8xf32>
    %115 = tpu.matmul %114, %95, %cst_57 {dimension_numbers = #tpu.dot_dimension_numbers<[1], [0], [0], [1], [0, 0, 1, 1], [], []>} : vector<8x8xf32>, vector<8x8xf32>, vector<8x8xf32> -> vector<8x8xf32>
    %116 = vector.extract_strided_slice %8 {offsets = [0, 24], sizes = [32, 8], strides = [1, 1]} : vector<32x32xf32> to vector<32x8xf32>
    %cst_58 = arith.constant dense<0.000000e+00> : vector<8x32xf32>
    %117 = tpu.matmul %115, %116, %cst_58 {dimension_numbers = #tpu.dot_dimension_numbers<[1], [1], [0], [0], [0, 0, 1, 0], [], []>} : vector<8x8xf32>, vector<32x8xf32>, vector<8x32xf32> -> vector<8x32xf32>
    %118 = arith.addf %92, %117 : vector<8x32xf32>
    %cst_59 = arith.constant dense<0.000000e+00> : vector<8xf32>
    %119 = vector.multi_reduction <add>, %118, %cst_59 [1] : vector<8x32xf32> to vector<8xf32>
    %120 = vector.shape_cast %119 : vector<8xf32> to vector<8x1xf32>
    %cst_60 = arith.constant 3.200000e+01 : f32
    %121 = vector.broadcast %cst_60 : f32 to vector<8x1xf32>
    %122 = arith.divf %120, %121 : vector<8x1xf32>
    %123 = vector.broadcast %122 : vector<8x1xf32> to vector<8x32xf32>
    %124 = arith.subf %118, %123 : vector<8x32xf32>
    %125 = arith.mulf %124, %124 : vector<8x32xf32>
    %cst_61 = arith.constant dense<0.000000e+00> : vector<8xf32>
    %126 = vector.multi_reduction <add>, %125, %cst_61 [1] : vector<8x32xf32> to vector<8xf32>
    %127 = vector.shape_cast %126 : vector<8xf32> to vector<8x1xf32>
    %cst_62 = arith.constant 3.200000e+01 : f32
    %128 = vector.broadcast %cst_62 : f32 to vector<8x1xf32>
    %129 = arith.divf %127, %128 : vector<8x1xf32>
    %cst_63 = arith.constant 9.99999974E-6 : f32
    %130 = vector.broadcast %cst_63 : f32 to vector<8x1xf32>
    %131 = arith.addf %129, %130 : vector<8x1xf32>
    %132 = math.rsqrt %131 : vector<8x1xf32>
    %133 = vector.broadcast %132 : vector<8x1xf32> to vector<8x32xf32>
    %134 = arith.mulf %124, %133 : vector<8x32xf32>
    %c0_64 = arith.constant 0 : index
    %c0_65 = arith.constant 0 : index
    %c0_66 = arith.constant 0 : index
    %135 = vector.load %arg9[%c0_64, %c0_65, %c0_66] : memref<1x8x32xf32, #tpu.memory_space<vmem>>, vector<1x8x32xf32>
    %136 = vector.shape_cast %135 : vector<1x8x32xf32> to vector<8x32xf32>
    %137 = vector.shape_cast %134 : vector<8x32xf32> to vector<1x8x32xf32>
    tpu.vector_store %arg9[%c0_64, %c0_65, %c0_66], %137 {strides = array<i32>} : memref<1x8x32xf32, #tpu.memory_space<vmem>>, vector<1x8x32xf32>,
    return
  }
  func.func @transform_0(%arg0: i32) -> (i32, i32, i32) {
    %c0_i32 = arith.constant 0 : i32
    %c0_i32_0 = arith.constant 0 : i32
    %c0_i32_1 = arith.constant 0 : i32
    return %arg0, %c0_i32, %c0_i32_0 : i32, i32, i32
  }
  func.func @transform_1(%arg0: i32) -> (i32, i32, i32) {
    %c0_i32 = arith.constant 0 : i32
    %c0_i32_0 = arith.constant 0 : i32
    %c0_i32_1 = arith.constant 0 : i32
    return %arg0, %c0_i32, %c0_i32_0 : i32, i32, i32
  }
  func.func @transform_2(%arg0: i32) -> (i32, i32, i32) {
    %c0_i32 = arith.constant 0 : i32
    %c0_i32_0 = arith.constant 0 : i32
    %c0_i32_1 = arith.constant 0 : i32
    return %arg0, %c0_i32, %c0_i32_0 : i32, i32, i32
  }
  func.func @transform_3(%arg0: i32) -> (i32, i32, i32, i32) {
    %c0_i32 = arith.constant 0 : i32
    %c0_i32_0 = arith.constant 0 : i32
    %c0_i32_1 = arith.constant 0 : i32
    %c0_i32_2 = arith.constant 0 : i32
    return %arg0, %c0_i32, %c0_i32_0, %c0_i32_1 : i32, i32, i32, i32
  }
  func.func @transform_4(%arg0: i32) -> (i32, i32) {
    %c0_i32 = arith.constant 0 : i32
    %c0_i32_0 = arith.constant 0 : i32
    %c0_i32_1 = arith.constant 0 : i32
    return %c0_i32, %c0_i32_0 : i32, i32
  }
  func.func @transform_5(%arg0: i32) -> (i32, i32) {
    %c0_i32 = arith.constant 0 : i32
    %c0_i32_0 = arith.constant 0 : i32
    %c0_i32_1 = arith.constant 0 : i32
    return %c0_i32, %c0_i32_0 : i32, i32
  }
  func.func @transform_6(%arg0: i32) -> (i32, i32) {
    %c0_i32 = arith.constant 0 : i32
    %c0_i32_0 = arith.constant 0 : i32
    %c0_i32_1 = arith.constant 0 : i32
    return %c0_i32, %c0_i32_0 : i32, i32
  }
  func.func @transform_7(%arg0: i32) -> (i32, i32) {
    %c0_i32 = arith.constant 0 : i32
    %c0_i32_0 = arith.constant 0 : i32
    %c0_i32_1 = arith.constant 0 : i32
    return %c0_i32, %c0_i32_0 : i32, i32
  }
  func.func @transform_8(%arg0: i32) -> (i32, i32, i32) {
    %c0_i32 = arith.constant 0 : i32
    %c0_i32_0 = arith.constant 0 : i32
    %c0_i32_1 = arith.constant 0 : i32
    return %arg0, %c0_i32, %c0_i32_0 : i32, i32, i32
  }
  func.func @transform_9(%arg0: i32) -> (i32, i32, i32, i32) {
    %c0_i32 = arith.constant 0 : i32
    %c0_i32_0 = arith.constant 0 : i32
    %c0_i32_1 = arith.constant 0 : i32
    %c0_i32_2 = arith.constant 0 : i32
    return %arg0, %c0_i32, %c0_i32_0, %c0_i32_1 : i32, i32, i32, i32
  }
}

</mosaic_0001>

<llo_original>
// kernel: tpu_custom_call.1
$region0: #{tpu_custom_call.1}
  #allocation0 [shape = 'u32[]', space=smem, size = 0x4, offset = 0x4, fixed_abs, tag = 'smem constant byte address 0x4 - core index']
  #allocation1 [shape = 'u32[144,128]{1,0:T(1,128)}', space=vmem, size = 0x12000, scoped, tag = 'internal scratch']
  %s0 = inlined_call_operand.hbm [shape: f32[6,8,32], index: 0, kind: input, shape index: {}]
  %s1 = inlined_call_operand.hbm [shape: f32[6,8,32], index: 1, kind: input, shape index: {}]
  %s2 = inlined_call_operand.hbm [shape: f32[6,8,32], index: 2, kind: input, shape index: {}]
  %s3 = inlined_call_operand.hbm [shape: f32[6,4,8,8], index: 3, kind: input, shape index: {}]
  %s4 = inlined_call_operand.hbm [shape: f32[32,32], index: 4, kind: input, shape index: {}]
  %s5 = inlined_call_operand.hbm [shape: f32[32,32], index: 5, kind: input, shape index: {}]
  %s6 = inlined_call_operand.hbm [shape: f32[32,32], index: 6, kind: input, shape index: {}]
  %s7 = inlined_call_operand.hbm [shape: f32[32,32], index: 7, kind: input, shape index: {}]
  %s8 = inlined_call_operand.hbm [shape: f32[6,8,32], index: 8, kind: output, shape index: {0}]
  %s9 = inlined_call_operand.hbm [shape: f32[6,4,8,8], index: 9, kind: output, shape index: {1}]
  %10 = xla_tuple %s8, %s9
  %s11 = sld [smem:[#allocation0]]
  $region105: #{tpu_custom_call.1} parent=0
    _
  %s13 = ssub.s32 1, %s11
  %s14 = scalar_select 0, %s13, %s11
  $region1: #{tpu_custom_call.1} parent=0
    #allocation2 [shape = 'u8[8192]{0}', space=vmem, size = 0x2000, scoped, tag = 'input window, operand 0']
    #allocation3 [shape = 's32[2]{0}', space=sflag, size = 0x8, scoped, tag = 'scoped memory for tpu_custom_call.1']
    #allocation4 [shape = 's32[2]{0}', space=sflag, size = 0x8, scoped, tag = 'scoped memory for tpu_custom_call.1']
    #allocation5 [shape = 'u8[8192]{0}', space=vmem, size = 0x2000, scoped, tag = 'input window, operand 1']
    #allocation6 [shape = 's32[2]{0}', space=sflag, size = 0x8, scoped, tag = 'scoped memory for tpu_custom_call.1']
    #allocation7 [shape = 'u8[8192]{0}', space=vmem, size = 0x2000, scoped, tag = 'input window, operand 2']
    #allocation8 [shape = 'u8[32768]{0}', space=vmem, size = 0x8000, scoped, tag = 'input window, operand 3']
    #allocation9 [shape = 's32[2]{0}', space=sflag, size = 0x8, scoped, tag = 'scoped memory for tpu_custom_call.1']
    #allocation10 [shape = 'u8[16384]{0}', space=vmem, size = 0x4000, scoped, tag = 'input window, operand 4, single buffered']
    #allocation11 [shape = 'u8[16384]{0}', space=vmem, size = 0x4000, scoped, tag = 'input window, operand 5, single buffered']
    #allocation12 [shape = 's32[1]{0}', space=sflag, size = 0x4, scoped, tag = 'scoped memory for tpu_custom_call.1']
    #allocation13 [shape = 'u8[16384]{0}', space=vmem, size = 0x4000, scoped, tag = 'input window, operand 6, single buffered']
    #allocation14 [shape = 'u8[16384]{0}', space=vmem, size = 0x4000, scoped, tag = 'input window, operand 7, single buffered']
    #allocation15 [shape = 's32[1]{0}', space=sflag, size = 0x4, scoped, tag = 'scoped memory for tpu_custom_call.1']
    #allocation16 [shape = 'u8[8192]{0}', space=vmem, size = 0x2000, scoped, tag = 'output window, operand 0']
    #allocation17 [shape = 'u8[32768]{0}', space=vmem, size = 0x8000, scoped, tag = 'output window, operand 1']
    #allocation18 [shape = 's32[2]{0}', space=sflag, size = 0x8, scoped, tag = 'scoped memory for tpu_custom_call.1']
    %15 = vsyncpa [#allocation3], 0
    %s16 = scalar_lea.sflag [#allocation3], 1
    %17 = vsyncpa %s16, 0
    %18 = vsyncpa [#allocation6], 0
    %s19 = scalar_lea.sflag [#allocation6], 1
    %20 = vsyncpa %s19, 0
    %21 = vsyncpa [#allocation9], 0
    %s22 = scalar_lea.sflag [#allocation9], 1
    %23 = vsyncpa %s22, 0
    %24 = vsyncpa [#allocation12], 0
    %25 = vsyncpa [#allocation15], 0
    %26 = vsyncpa [#allocation4], 0
    %s27 = scalar_lea.sflag [#allocation4], 1
    %28 = vsyncpa %s27, 0
    %29 = vsyncpa [#allocation18], 0
    %s30 = scalar_lea.sflag [#allocation18], 1
    %31 = vsyncpa %s30, 0
    loop: start=0, step=1, limit=8
    $region2: #{tpu_custom_call.1} parent=1 // loop_pre_header
      _
    $region3: #{tpu_custom_call.1} parent=1 // loop_header
      %s33 = sphi 0, %s37
      %p34 = scmp.ge.s32.totalorder %s33, 8
      %s43 = sphi 0, %s45
      %s46 = sphi 0, %s43
      %s47 = sphi 0, %s46
      %s63 = sphi 0, %s47
      %s69 = sphi 0, %s71
      %s72 = sphi 0, %s69
      %s73 = sphi 0, %s72
      %s89 = sphi 0, %s73
      %s95 = sphi 0, %s97
      %s98 = sphi 0, %s95
      %s99 = sphi 0, %s98
      %s115 = sphi 0, %s99
      %s121 = sphi 0, %s123
      %s124 = sphi 0, %s121
      %s125 = sphi 0, %s124
      %s141 = sphi 0, %s125
      %s145 = sphi 0, %s145
      %s147 = sphi 0, %s145
      %s148 = sphi 0, %s147
      %s162 = sphi 0, %s148
      %s166 = sphi 0, %s166
      %s168 = sphi 0, %s166
      %s169 = sphi 0, %s168
      %s183 = sphi 0, %s169
      %s187 = sphi 0, %s187
      %s189 = sphi 0, %s187
      %s190 = sphi 0, %s189
      %s204 = sphi 0, %s190
      %s208 = sphi 0, %s208
      %s210 = sphi 0, %s208
      %s211 = sphi 0, %s210
      %s225 = sphi 0, %s211
      %s231 = sphi 0, %s233
      %s234 = sphi 0, %s231
      %s235 = sphi 0, %s234
      %s251 = sphi 0, %s235
      %s257 = sphi 0, %s259
      %s260 = sphi 0, %s257
      %s261 = sphi 0, %s260
      %s277 = sphi 0, %s261
    $region4: #{tpu_custom_call.1} parent=1 // loop_header_branch
      %36 = sbr.rel (%p34) target = $region8
    $region5: #{tpu_custom_call.1} parent=1 // loop_body
      %s38 = ssub.s32 %s33, 1
      %s39 = ssub.s32 %s33, 2
      %s40 = sadd.s32 %s33, 1
      %s41 = ssub.s32 %s33, %s40
      %p42 = scmp.eq.s32.totalorder %s41, 0
      %s44 = sadd.s32 %s43, 1
      %s45 = scalar_select %p42, %s43, %s44
      %p48 = pneg %p42
      %p49 = scmp.eq.s32.totalorder %s33, 5
      %p50 = por %p48, %p49
      %p51 = scmp.ne.s32.totalorder %s43, %s46
      %p52 = scmp.eq.s32.totalorder %s33, 0
      %p53 = por %p51, %p52
      %p54 = scmp.ne.s32.totalorder %s43, %s46
      %p55 = scmp.eq.s32.totalorder %s38, 5
      %p56 = por %p54, %p55
      %p57 = scmp.ne.s32.totalorder %s46, %s47
      %p58 = scmp.eq.s32.totalorder %s38, 0
      %p59 = por %p57, %p58
      %p60 = scmp.ne.s32.totalorder %s46, %s47
      %p61 = scmp.eq.s32.totalorder %s39, 5
      %p62 = por %p60, %p61
      %p64 = scmp.ne.s32.totalorder %s47, %s63
      %p65 = scmp.eq.s32.totalorder %s39, 0
      %p66 = por %p64, %p65
      %s67 = ssub.s32 %s33, %s40
      %p68 = scmp.eq.s32.totalorder %s67, 0
      %s70 = sadd.s32 %s69, 1
      %s71 = scalar_select %p68, %s69, %s70
      %p74 = pneg %p68
      %p75 = scmp.eq.s32.totalorder %s33, 5
      %p76 = por %p74, %p75
      %p77 = scmp.ne.s32.totalorder %s69, %s72
      %p78 = scmp.eq.s32.totalorder %s33, 0
      %p79 = por %p77, %p78
      %p80 = scmp.ne.s32.totalorder %s69, %s72
      %p81 = scmp.eq.s32.totalorder %s38, 5
      %p82 = por %p80, %p81
      %p83 = scmp.ne.s32.totalorder %s72, %s73
      %p84 = scmp.eq.s32.totalorder %s38, 0
      %p85 = por %p83, %p84
      %p86 = scmp.ne.s32.totalorder %s72, %s73
      %p87 = scmp.eq.s32.totalorder %s39, 5
      %p88 = por %p86, %p87
      %p90 = scmp.ne.s32.totalorder %s73, %s89
      %p91 = scmp.eq.s32.totalorder %s39, 0
      %p92 = por %p90, %p91
      %s93 = ssub.s32 %s33, %s40
      %p94 = scmp.eq.s32.totalorder %s93, 0
      %s96 = sadd.s32 %s95, 1
      %s97 = scalar_select %p94, %s95, %s96
      %p100 = pneg %p94
      %p101 = scmp.eq.s32.totalorder %s33, 5
      %p102 = por %p100, %p101
      %p103 = scmp.ne.s32.totalorder %s95, %s98
      %p104 = scmp.eq.s32.totalorder %s33, 0
      %p105 = por %p103, %p104
      %p106 = scmp.ne.s32.totalorder %s95, %s98
      %p107 = scmp.eq.s32.totalorder %s38, 5
      %p108 = por %p106, %p107
      %p109 = scmp.ne.s32.totalorder %s98, %s99
      %p110 = scmp.eq.s32.totalorder %s38, 0
      %p111 = por %p109, %p110
      %p112 = scmp.ne.s32.totalorder %s98, %s99
      %p113 = scmp.eq.s32.totalorder %s39, 5
      %p114 = por %p112, %p113
      %p116 = scmp.ne.s32.totalorder %s99, %s115
      %p117 = scmp.eq.s32.totalorder %s39, 0
      %p118 = por %p116, %p117
      %s119 = ssub.s32 %s33, %s40
      %p120 = scmp.eq.s32.totalorder %s119, 0
      %s122 = sadd.s32 %s121, 1
      %s123 = scalar_select %p120, %s121, %s122
      %p126 = pneg %p120
      %p127 = scmp.eq.s32.totalorder %s33, 5
      %p128 = por %p126, %p127
      %p129 = scmp.ne.s32.totalorder %s121, %s124
      %p130 = scmp.eq.s32.totalorder %s33, 0
      %p131 = por %p129, %p130
      %p132 = scmp.ne.s32.totalorder %s121, %s124
      %p133 = scmp.eq.s32.totalorder %s38, 5
      %p134 = por %p132, %p133
      %p135 = scmp.ne.s32.totalorder %s124, %s125
      %p136 = scmp.eq.s32.totalorder %s38, 0
      %p137 = por %p135, %p136
      %p138 = scmp.ne.s32.totalorder %s124, %s125
      %p139 = scmp.eq.s32.totalorder %s39, 5
      %p140 = por %p138, %p139
      %p142 = scmp.ne.s32.totalorder %s125, %s141
      %p143 = scmp.eq.s32.totalorder %s39, 0
      %p144 = por %p142, %p143
      %s146 = sadd.s32 %s145, 1
      %p149 = scmp.eq.s32.totalorder %s33, 5
      %p150 = scmp.ne.s32.totalorder %s145, %s147
      %p151 = scmp.eq.s32.totalorder %s33, 0
      %p152 = por %p150, %p151
      %p153 = scmp.ne.s32.totalorder %s145, %s147
      %p154 = scmp.eq.s32.totalorder %s38, 5
      %p155 = por %p153, %p154
      %p156 = scmp.ne.s32.totalorder %s147, %s148
      %p157 = scmp.eq.s32.totalorder %s38, 0
      %p158 = por %p156, %p157
      %p159 = scmp.ne.s32.totalorder %s147, %s148
      %p160 = scmp.eq.s32.totalorder %s39, 5
      %p161 = por %p159, %p160
      %p163 = scmp.ne.s32.totalorder %s148, %s162
      %p164 = scmp.eq.s32.totalorder %s39, 0
      %p165 = por %p163, %p164
      %s167 = sadd.s32 %s166, 1
      %p170 = scmp.eq.s32.totalorder %s33, 5
      %p171 = scmp.ne.s32.totalorder %s166, %s168
      %p172 = scmp.eq.s32.totalorder %s33, 0
      %p173 = por %p171, %p172
      %p174 = scmp.ne.s32.totalorder %s166, %s168
      %p175 = scmp.eq.s32.totalorder %s38, 5
      %p176 = por %p174, %p175
      %p177 = scmp.ne.s32.totalorder %s168, %s169
      %p178 = scmp.eq.s32.totalorder %s38, 0
      %p179 = por %p177, %p178
      %p180 = scmp.ne.s32.totalorder %s168, %s169
      %p181 = scmp.eq.s32.totalorder %s39, 5
      %p182 = por %p180, %p181
      %p184 = scmp.ne.s32.totalorder %s169, %s183
      %p185 = scmp.eq.s32.totalorder %s39, 0
      %p186 = por %p184, %p185
      %s188 = sadd.s32 %s187, 1
      %p191 = scmp.eq.s32.totalorder %s33, 5
      %p192 = scmp.ne.s32.totalorder %s187, %s189
      %p193 = scmp.eq.s32.totalorder %s33, 0
      %p194 = por %p192, %p193
      %p195 = scmp.ne.s32.totalorder %s187, %s189
      %p196 = scmp.eq.s32.totalorder %s38, 5
      %p197 = por %p195, %p196
      %p198 = scmp.ne.s32.totalorder %s189, %s190
      %p199 = scmp.eq.s32.totalorder %s38, 0
      %p200 = por %p198, %p199
      %p201 = scmp.ne.s32.totalorder %s189, %s190
      %p202 = scmp.eq.s32.totalorder %s39, 5
      %p203 = por %p201, %p202
      %p205 = scmp.ne.s32.totalorder %s190, %s204
      %p206 = scmp.eq.s32.totalorder %s39, 0
      %p207 = por %p205, %p206
      %s209 = sadd.s32 %s208, 1
      %p212 = scmp.eq.s32.totalorder %s33, 5
      %p213 = scmp.ne.s32.totalorder %s208, %s210
      %p214 = scmp.eq.s32.totalorder %s33, 0
      %p215 = por %p213, %p214
      %p216 = scmp.ne.s32.totalorder %s208, %s210
      %p217 = scmp.eq.s32.totalorder %s38, 5
      %p218 = por %p216, %p217
      %p219 = scmp.ne.s32.totalorder %s210, %s211
      %p220 = scmp.eq.s32.totalorder %s38, 0
      %p221 = por %p219, %p220
      %p222 = scmp.ne.s32.totalorder %s210, %s211
      %p223 = scmp.eq.s32.totalorder %s39, 5
      %p224 = por %p222, %p223
      %p226 = scmp.ne.s32.totalorder %s211, %s225
      %p227 = scmp.eq.s32.totalorder %s39, 0
      %p228 = por %p226, %p227
      %s229 = ssub.s32 %s33, %s40
      %p230 = scmp.eq.s32.totalorder %s229, 0
      %s232 = sadd.s32 %s231, 1
      %s233 = scalar_select %p230, %s231, %s232
      %p236 = pneg %p230
      %p237 = scmp.eq.s32.totalorder %s33, 5
      %p238 = por %p236, %p237
      %p239 = scmp.ne.s32.totalorder %s231, %s234
      %p240 = scmp.eq.s32.totalorder %s33, 0
      %p241 = por %p239, %p240
      %p242 = scmp.ne.s32.totalorder %s231, %s234
      %p243 = scmp.eq.s32.totalorder %s38, 5
      %p244 = por %p242, %p243
      %p245 = scmp.ne.s32.totalorder %s234, %s235
      %p246 = scmp.eq.s32.totalorder %s38, 0
      %p247 = por %p245, %p246
      %p248 = scmp.ne.s32.totalorder %s234, %s235
      %p249 = scmp.eq.s32.totalorder %s39, 5
      %p250 = por %p248, %p249
      %p252 = scmp.ne.s32.totalorder %s235, %s251
      %p253 = scmp.eq.s32.totalorder %s39, 0
      %p254 = por %p252, %p253
      %s255 = ssub.s32 %s33, %s40
      %p256 = scmp.eq.s32.totalorder %s255, 0
      %s258 = sadd.s32 %s257, 1
      %s259 = scalar_select %p256, %s257, %s258
      %p262 = pneg %p256
      %p263 = scmp.eq.s32.totalorder %s33, 5
      %p264 = por %p262, %p263
      %p265 = scmp.ne.s32.totalorder %s257, %s260
      %p266 = scmp.eq.s32.totalorder %s33, 0
      %p267 = por %p265, %p266
      %p268 = scmp.ne.s32.totalorder %s257, %s260
      %p269 = scmp.eq.s32.totalorder %s38, 5
      %p270 = por %p268, %p269
      %p271 = scmp.ne.s32.totalorder %s260, %s261
      %p272 = scmp.eq.s32.totalorder %s38, 0
      %p273 = por %p271, %p272
      %p274 = scmp.ne.s32.totalorder %s260, %s261
      %p275 = scmp.eq.s32.totalorder %s39, 5
      %p276 = por %p274, %p275
      %p278 = scmp.ne.s32.totalorder %s261, %s277
      %p279 = scmp.eq.s32.totalorder %s39, 0
      %p280 = por %p278, %p279
      %p281 = scmp.le.s32.totalorder 1, %s33
      %p282 = scmp.lt.s32.totalorder %s33, 7
      %p283 = pnand %p281, %p282
      %p284 = pneg %p283
      // Predicated region
      $region9: #{tpu_custom_call.1} parent=5 // pred_check
        _
      $region10: #{tpu_custom_call.1} parent=5 // pred_check_branch
        %286 = sbr.rel (%p283) target = $region12
      $region11: #{tpu_custom_call.1} parent=5 // pred_region
        %s287 = ssub.s32 %s33, 1
        // Predicated region
        $region13: #{tpu_custom_call.1} parent=11 // pred_check
          %p288 = pneg %p158
        $region14: #{tpu_custom_call.1} parent=11 // pred_check_branch
          %290 = sbr.rel (%p288) target = $region16
        $region15: #{tpu_custom_call.1} parent=11 // pred_region
          %s292 = ssub.s32 512, 512
          %293 = vsyncadd [#allocation9], %s292
          %s294 = sshll.u32 [#allocation10], 4
          %s295 = int_to_ptr.vmem [resolvable:$true] %s294
          %300 = dma.hbm_to_vmem [thread:$0]  %s4, 512, %s295, [#allocation9], 128, 128, 8
        $region16: #{tpu_custom_call.1} parent=11 // pred_fallthru
          _
        // Predicated region
        $region17: #{tpu_custom_call.1} parent=11 // pred_check
          %p301 = pneg %p179
        $region18: #{tpu_custom_call.1} parent=11 // pred_check_branch
          %303 = sbr.rel (%p301) target = $region20
        $region19: #{tpu_custom_call.1} parent=11 // pred_region
          %s305 = ssub.s32 512, 512
          %306 = vsyncadd [#allocation12], %s305
          %s307 = sshll.u32 [#allocation11], 4
          %s308 = int_to_ptr.vmem [resolvable:$true] %s307
          %313 = dma.hbm_to_vmem [thread:$0]  %s5, 512, %s308, [#allocation12], 128, 128, 8
        $region20: #{tpu_custom_call.1} parent=11 // pred_fallthru
          _
        // Predicated region
        $region21: #{tpu_custom_call.1} parent=11 // pred_check
          %p314 = pneg %p200
        $region22: #{tpu_custom_call.1} parent=11 // pred_check_branch
          %316 = sbr.rel (%p314) target = $region24
        $region23: #{tpu_custom_call.1} parent=11 // pred_region
          %s318 = ssub.s32 512, 512
          %319 = vsyncadd [#allocation12], %s318
          %s320 = sshll.u32 [#allocation13], 4
          %s321 = int_to_ptr.vmem [resolvable:$true] %s320
          %326 = dma.hbm_to_vmem [thread:$0]  %s6, 512, %s321, [#allocation12], 128, 128, 8
        $region24: #{tpu_custom_call.1} parent=11 // pred_fallthru
          _
        // Predicated region
        $region25: #{tpu_custom_call.1} parent=11 // pred_check
          %p327 = pneg %p221
        $region26: #{tpu_custom_call.1} parent=11 // pred_check_branch
          %329 = sbr.rel (%p327) target = $region28
        $region27: #{tpu_custom_call.1} parent=11 // pred_region
          %s331 = ssub.s32 512, 512
          %332 = vsyncadd [#allocation15], %s331
          %s333 = sshll.u32 [#allocation14], 4
          %s334 = int_to_ptr.vmem [resolvable:$true] %s333
          %339 = dma.hbm_to_vmem [thread:$0]  %s7, 512, %s334, [#allocation15], 128, 128, 8
        $region28: #{tpu_custom_call.1} parent=11 // pred_fallthru
          _
      $region12: #{tpu_custom_call.1} parent=5 // pred_fallthru
        _
      %p340 = scmp.lt.s32.totalorder %s33, 6
      // Predicated region
      $region29: #{tpu_custom_call.1} parent=5 // pred_check
        %p341 = pneg %p340
      $region30: #{tpu_custom_call.1} parent=5 // pred_check_branch
        %343 = sbr.rel (%p341) target = $region32
      $region31: #{tpu_custom_call.1} parent=5 // pred_region
        // Predicated region
        $region33: #{tpu_custom_call.1} parent=31 // pred_check
          %p344 = pneg %p53
        $region34: #{tpu_custom_call.1} parent=31 // pred_check_branch
          %346 = sbr.rel (%p344) target = $region36
        $region35: #{tpu_custom_call.1} parent=31 // pred_region
          %s347 = sand.u32 %s43, 1
          %s348 = scalar_lea.sflag [#allocation3], %s347
          %s349 = sand.u32 %s43, 1
          %s350 = smul.addr %s349, 8
          %s351 = scalar_lea.vmem [#allocation2], %s350
          %s353 = ssub.s32 128, 128
          %354 = vsyncadd %s348, %s353
          %s355 = smul.addr %s33, 128
          %s356 = scalar_lea.hbm %s0, %s355
          %s358 = sshll.u32 %s351, 4
          %s359 = int_to_ptr.vmem [resolvable:$true] %s358
          %361 = dma.hbm_to_vmem [thread:$0]  %s356, 128, %s359, %s348
        $region36: #{tpu_custom_call.1} parent=31 // pred_fallthru
          _
        // Predicated region
        $region37: #{tpu_custom_call.1} parent=31 // pred_check
          %p362 = pneg %p79
        $region38: #{tpu_custom_call.1} parent=31 // pred_check_branch
          %364 = sbr.rel (%p362) target = $region40
        $region39: #{tpu_custom_call.1} parent=31 // pred_region
          %s365 = sand.u32 %s33, 1
          %s366 = scalar_lea.sflag [#allocation6], %s365
          %s367 = sand.u32 %s69, 1
          %s368 = smul.addr %s367, 8
          %s369 = scalar_lea.vmem [#allocation5], %s368
          %s371 = ssub.s32 128, 128
          %372 = vsyncadd %s366, %s371
          %s373 = smul.addr %s33, 128
          %s374 = scalar_lea.hbm %s1, %s373
          %s376 = sshll.u32 %s369, 4
          %s377 = int_to_ptr.vmem [resolvable:$true] %s376
          %379 = dma.hbm_to_vmem [thread:$0]  %s374, 128, %s377, %s366
        $region40: #{tpu_custom_call.1} parent=31 // pred_fallthru
          _
        // Predicated region
        $region41: #{tpu_custom_call.1} parent=31 // pred_check
          %p380 = pneg %p105
        $region42: #{tpu_custom_call.1} parent=31 // pred_check_branch
          %382 = sbr.rel (%p380) target = $region44
        $region43: #{tpu_custom_call.1} parent=31 // pred_region
          %s383 = sand.u32 %s33, 1
          %s384 = scalar_lea.sflag [#allocation6], %s383
          %s385 = sand.u32 %s95, 1
          %s386 = smul.addr %s385, 8
          %s387 = scalar_lea.vmem [#allocation7], %s386
          %s389 = ssub.s32 128, 128
          %390 = vsyncadd %s384, %s389
          %s391 = smul.addr %s33, 128
          %s392 = scalar_lea.hbm %s2, %s391
          %s394 = sshll.u32 %s387, 4
          %s395 = int_to_ptr.vmem [resolvable:$true] %s394
          %397 = dma.hbm_to_vmem [thread:$0]  %s392, 128, %s395, %s384
        $region44: #{tpu_custom_call.1} parent=31 // pred_fallthru
          _
        // Predicated region
        $region45: #{tpu_custom_call.1} parent=31 // pred_check
          %p398 = pneg %p131
        $region46: #{tpu_custom_call.1} parent=31 // pred_check_branch
          %400 = sbr.rel (%p398) target = $region48
        $region47: #{tpu_custom_call.1} parent=31 // pred_region
          %s401 = sand.u32 %s33, 1
          %s402 = scalar_lea.sflag [#allocation9], %s401
          %s403 = sand.u32 %s121, 1
          %s404 = smul.addr %s403, 32
          %s405 = scalar_lea.vmem [#allocation8], %s404
          %s407 = ssub.s32 512, 512
          %408 = vsyncadd %s402, %s407
          %s409 = smul.addr %s33, 4
          %s410 = smul.addr %s409, 128
          %s411 = scalar_lea.hbm %s3, %s410
          %s412 = sshll.u32 %s405, 4
          %s413 = int_to_ptr.vmem [resolvable:$true] %s412
          %418 = dma.hbm_to_vmem [thread:$0]  %s411, 512, %s413, %s402, 128, 128, 8
        $region48: #{tpu_custom_call.1} parent=31 // pred_fallthru
          _
      $region32: #{tpu_custom_call.1} parent=5 // pred_fallthru
        _
      %p419 = scmp.le.s32.totalorder 1, %s33
      %p420 = scmp.lt.s32.totalorder %s33, 7
      %p421 = pnand %p419, %p420
      %p422 = pneg %p421
      // Predicated region
      $region49: #{tpu_custom_call.1} parent=5 // pred_check
        _
      $region50: #{tpu_custom_call.1} parent=5 // pred_check_branch
        %424 = sbr.rel (%p421) target = $region52
      $region51: #{tpu_custom_call.1} parent=5 // pred_region
        %s425 = ssub.s32 %s33, 1
        %s426 = sand.u32 %s46, 1
        %s427 = scalar_lea.sflag [#allocation3], %s426
        %s428 = sand.u32 %s46, 1
        %s429 = smul.addr %s428, 8
        %s430 = scalar_lea.vmem [#allocation2], %s429
        // Predicated region
        $region53: #{tpu_custom_call.1} parent=51 // pred_check
          %p431 = pneg %p59
        $region54: #{tpu_custom_call.1} parent=51 // pred_check_branch
          %433 = sbr.rel (%p431) target = $region56
        $region55: #{tpu_custom_call.1} parent=51 // pred_region
          %434 = dma.done %s427, 128
        $region56: #{tpu_custom_call.1} parent=51 // pred_fallthru
          _
        %s435 = sand.u32 %s38, 1
        %s436 = scalar_lea.sflag [#allocation6], %s435
        %s437 = sand.u32 %s72, 1
        %s438 = smul.addr %s437, 8
        %s439 = scalar_lea.vmem [#allocation5], %s438
        // Predicated region
        $region57: #{tpu_custom_call.1} parent=51 // pred_check
          %p440 = pneg %p85
        $region58: #{tpu_custom_call.1} parent=51 // pred_check_branch
          %442 = sbr.rel (%p440) target = $region60
        $region59: #{tpu_custom_call.1} parent=51 // pred_region
          %443 = dma.done %s436, 128
        $region60: #{tpu_custom_call.1} parent=51 // pred_fallthru
          _
        %s444 = sand.u32 %s38, 1
        %s445 = scalar_lea.sflag [#allocation6], %s444
        %s446 = sand.u32 %s98, 1
        %s447 = smul.addr %s446, 8
        %s448 = scalar_lea.vmem [#allocation7], %s447
        // Predicated region
        $region61: #{tpu_custom_call.1} parent=51 // pred_check
          %p449 = pneg %p111
        $region62: #{tpu_custom_call.1} parent=51 // pred_check_branch
          %451 = sbr.rel (%p449) target = $region64
        $region63: #{tpu_custom_call.1} parent=51 // pred_region
          %452 = dma.done %s445, 128
        $region64: #{tpu_custom_call.1} parent=51 // pred_fallthru
          _
        %s453 = sand.u32 %s38, 1
        %s454 = scalar_lea.sflag [#allocation9], %s453
        %s455 = sand.u32 %s124, 1
        %s456 = smul.addr %s455, 32
        %s457 = scalar_lea.vmem [#allocation8], %s456
        // Predicated region
        $region65: #{tpu_custom_call.1} parent=51 // pred_check
          %p458 = pneg %p137
        $region66: #{tpu_custom_call.1} parent=51 // pred_check_branch
          %460 = sbr.rel (%p458) target = $region68
        $region67: #{tpu_custom_call.1} parent=51 // pred_region
          %461 = dma.done %s454, 512
        $region68: #{tpu_custom_call.1} parent=51 // pred_fallthru
          _
        // Predicated region
        $region69: #{tpu_custom_call.1} parent=51 // pred_check
          %p462 = pneg %p158
        $region70: #{tpu_custom_call.1} parent=51 // pred_check_branch
          %464 = sbr.rel (%p462) target = $region72
        $region71: #{tpu_custom_call.1} parent=51 // pred_region
          %465 = dma.done [#allocation9], 512
        $region72: #{tpu_custom_call.1} parent=51 // pred_fallthru
          _
        // Predicated region
        $region73: #{tpu_custom_call.1} parent=51 // pred_check
          %p466 = pneg %p179
        $region74: #{tpu_custom_call.1} parent=51 // pred_check_branch
          %468 = sbr.rel (%p466) target = $region76
        $region75: #{tpu_custom_call.1} parent=51 // pred_region
          %469 = dma.done [#allocation12], 512
        $region76: #{tpu_custom_call.1} parent=51 // pred_fallthru
          _
        // Predicated region
        $region77: #{tpu_custom_call.1} parent=51 // pred_check
          %p470 = pneg %p200
        $region78: #{tpu_custom_call.1} parent=51 // pred_check_branch
          %472 = sbr.rel (%p470) target = $region80
        $region79: #{tpu_custom_call.1} parent=51 // pred_region
          %473 = dma.done [#allocation12], 512
        $region80: #{tpu_custom_call.1} parent=51 // pred_fallthru
          _
        // Predicated region
        $region81: #{tpu_custom_call.1} parent=51 // pred_check
          %p474 = pneg %p221
        $region82: #{tpu_custom_call.1} parent=51 // pred_check_branch
          %476 = sbr.rel (%p474) target = $region84
        $region83: #{tpu_custom_call.1} parent=51 // pred_region
          %477 = dma.done [#allocation15], 512
        $region84: #{tpu_custom_call.1} parent=51 // pred_fallthru
          _
        %s478 = sand.u32 %s46, 1
        %s479 = scalar_lea.sflag [#allocation3], %s478
        %s480 = sand.u32 %s46, 1
        %s481 = smul.addr %s480, 8
        %s482 = scalar_lea.vmem [#allocation2], %s481
        %p483 = pneg %p59
        %p484 = pneg %p56
        %s485 = sand.u32 %s38, 1
        %s486 = scalar_lea.sflag [#allocation6], %s485
        %s487 = sand.u32 %s72, 1
        %s488 = smul.addr %s487, 8
        %s489 = scalar_lea.vmem [#allocation5], %s488
        %p490 = pneg %p85
        %p491 = pneg %p82
        %s492 = sand.u32 %s38, 1
        %s493 = scalar_lea.sflag [#allocation6], %s492
        %s494 = sand.u32 %s98, 1
        %s495 = smul.addr %s494, 8
        %s496 = scalar_lea.vmem [#allocation7], %s495
        %p497 = pneg %p111
        %p498 = pneg %p108
        %s499 = sand.u32 %s38, 1
        %s500 = scalar_lea.sflag [#allocation9], %s499
        %s501 = sand.u32 %s124, 1
        %s502 = smul.addr %s501, 32
        %s503 = scalar_lea.vmem [#allocation8], %s502
        %p504 = pneg %p137
        %p505 = pneg %p134
        %p506 = pneg %p158
        %p507 = pneg %p155
        %p508 = pneg %p179
        %p509 = pneg %p176
        %p510 = pneg %p200
        %p511 = pneg %p197
        %p512 = pneg %p221
        %p513 = pneg %p218
        %p514 = pneg %p247
        %p515 = pneg %p244
        %s516 = sand.u32 %s234, 1
        %s517 = scalar_lea.sflag [#allocation4], %s516
        %s518 = sand.u32 %s234, 1
        %s519 = smul.addr %s518, 8
        %s520 = scalar_lea.vmem [#allocation16], %s519
        %p521 = pneg %p273
        %p522 = pneg %p270
        %s523 = sand.u32 %s260, 1
        %s524 = scalar_lea.sflag [#allocation18], %s523
        %s525 = sand.u32 %s260, 1
        %s526 = smul.addr %s525, 32
        %s527 = scalar_lea.vmem [#allocation17], %s526
        %v528 = vld [vmem:[%s430] sm:$0xff]
        %v529 = vld [vmem:[%s439] sm:$0xff]
        %v530 = vld [vmem:[%s448] sm:$0xff]
        %v531 = vld [vmem:[%s457] sm:$0xff]
        %v532 = vld [vmem:[%s457 + $0x8] sm:$0xff]
        %v533 = vld [vmem:[%s457 + $0x10] sm:$0xff]
        %v534 = vld [vmem:[%s457 + $0x18] sm:$0xff]
        %v535 = vld [vmem:[#allocation14] sm:$0xff]
        %v536 = vld [vmem:[#allocation14 + $0x8] sm:$0xff]
        %v537 = vld [vmem:[#allocation14 + $0x10] sm:$0xff]
        %v538 = vld [vmem:[#allocation14 + $0x18] sm:$0xff]
        %v539 = vld [vmem:[#allocation10] sm:$0xff]
        %v540 = vld [vmem:[#allocation10 + $0x8] sm:$0xff]
        %v541 = vld [vmem:[#allocation10 + $0x10] sm:$0xff]
        %v542 = vld [vmem:[#allocation10 + $0x18] sm:$0xff]
        %vm543 = vcmask 261120
        %v545 = vsel %vm543, %v528, 0
        %v548 = vsel %vm543, %v539, 0
        %v551 = vsel %vm543, %v540, 0
        %v554 = vsel %vm543, %v541, 0
        %v557 = vsel %vm543, %v542, 0
        %559 = vmatprep.subr.mxu0 0.0
        %560 = vmatpush1.xpose.msra.mxu0 %v548
        %561 = vmatprep.subr.mxu0 0.0
        %562 = vmatpush1.xpose.msra.mxu0 %v551
        %563 = vmatprep.subr.mxu0 0.0
        %564 = vmatpush1.xpose.msra.mxu0 %v554
        %565 = vmatprep.subr.mxu0 0.0
        %566 = vmatpush1.xpose.msra.mxu0 %v557
        %567 = vmatprep.subr.mxu0 0.0
        %568 = vmatpush1.xpose.msra.mxu0 0.0
        %569 = vmatprep.subr.mxu0 0.0
        %570 = vmatpush1.xpose.msra.mxu0 0.0
        %571 = vmatprep.subr.mxu0 0.0
        %572 = vmatpush1.xpose.msra.mxu0 0.0
        %573 = vmatprep.subr.mxu0 0.0
        %574 = vmatpush1.xpose.msra.mxu0 0.0
        %575 = vmatprep.subr.mxu0 0.0
        %576 = vmatpush1.xpose.msra.mxu0 0.0
        %577 = vmatprep.subr.mxu0 0.0
        %578 = vmatpush1.xpose.msra.mxu0 0.0
        %579 = vmatprep.subr.mxu0 0.0
        %580 = vmatpush1.xpose.msra.mxu0 0.0
        %581 = vmatprep.subr.mxu0 0.0
        %582 = vmatpush1.xpose.msra.mxu0 0.0
        %583 = vmatprep.subr.mxu0 0.0
        %584 = vmatpush1.xpose.msra.mxu0 0.0
        %585 = vmatprep.subr.mxu0 0.0
        %586 = vmatpush1.xpose.msra.mxu0 0.0
        %587 = vmatprep.subr.mxu0 0.0
        %588 = vmatpush1.xpose.msra.mxu0 0.0
        %589 = vmatprep.subr.mxu0 0.0
        %590 = vmatpush1.xpose.msra.mxu0 0.0
        %591 = vmatprep.subr.mxu0 0.0
        %592 = vmatpush1.xpose.msra.mxu0 0.0
        %593 = vmatprep.subr.mxu0 0.0
        %594 = vmatpush1.xpose.msra.mxu0 0.0
        %595 = vmatprep.subr.mxu0 0.0
        %596 = vmatpush1.xpose.msra.mxu0 0.0
        %597 = vmatprep.subr.mxu0 0.0
        %598 = vmatpush1.xpose.msra.mxu0 0.0
        %599 = vmatprep.subr.mxu0 0.0
        %600 = vmatpush1.xpose.msra.mxu0 0.0
        %601 = vmatprep.subr.mxu0 0.0
        %602 = vmatpush1.xpose.msra.mxu0 0.0
        %603 = vmatprep.subr.mxu0 0.0
        %604 = vmatpush1.xpose.msra.mxu0 0.0
        %605 = vmatprep.subr.mxu0 0.0
        %606 = vmatpush1.xpose.msra.mxu0 0.0
        %607 = vmatprep.subr.mxu0 0.0
        %608 = vmatpush1.xpose.msra.mxu0 0.0
        %609 = vmatprep.subr.mxu0 0.0
        %610 = vmatpush1.xpose.msra.mxu0 0.0
        %611 = vmatprep.subr.mxu0 0.0
        %612 = vmatpush1.xpose.msra.mxu0 0.0
        %613 = vmatprep.subr.mxu0 0.0
        %614 = vmatpush1.xpose.msra.mxu0 0.0
        %615 = vmatprep.subr.mxu0 0.0
        %616 = vmatpush1.xpose.msra.mxu0 0.0
        %617 = vmatprep.subr.mxu0 0.0
        %618 = vmatpush1.xpose.msra.mxu0 0.0
        %619 = vmatprep.subr.mxu0 0.0
        %620 = vmatpush1.xpose.msra.mxu0 0.0
        %621 = vmatprep.subr.mxu0 0.0
        %622 = vmatpush1.xpose.msra.mxu0 0.0
        %623 = vmatprep.mubr.f32.mxu0 0.0
        %624 = vmatmul.mubr.f32.gmra.mrb[0].mxu0 %v545
        %v625 = vpop.f32.mrb[0].mxu0
        %v626 = vadd.f32 0.0, %v625
        %v627 = vpop.f32.mrb[0].mxu0
        %628 = vdwg.mxu0
        %v629 = vld [vmem:[#allocation11] sm:$0xff]
        %v630 = vld [vmem:[#allocation11 + $0x8] sm:$0xff]
        %v631 = vld [vmem:[#allocation11 + $0x10] sm:$0xff]
        %v632 = vld [vmem:[#allocation11 + $0x18] sm:$0xff]
        %v634 = vsel %vm543, %v529, 0
        %v637 = vsel %vm543, %v629, 0
        %v640 = vsel %vm543, %v630, 0
        %v643 = vsel %vm543, %v631, 0
        %v646 = vsel %vm543, %v632, 0
        %648 = vmatprep.subr.mxu0 0.0
        %649 = vmatpush1.xpose.msra.mxu0 %v637
        %650 = vmatprep.subr.mxu0 0.0
        %651 = vmatpush1.xpose.msra.mxu0 %v640
        %652 = vmatprep.subr.mxu0 0.0
        %653 = vmatpush1.xpose.msra.mxu0 %v643
        %654 = vmatprep.subr.mxu0 0.0
        %655 = vmatpush1.xpose.msra.mxu0 %v646
        %656 = vmatprep.subr.mxu0 0.0
        %657 = vmatpush1.xpose.msra.mxu0 0.0
        %658 = vmatprep.subr.mxu0 0.0
        %659 = vmatpush1.xpose.msra.mxu0 0.0
        %660 = vmatprep.subr.mxu0 0.0
        %661 = vmatpush1.xpose.msra.mxu0 0.0
        %662 = vmatprep.subr.mxu0 0.0
        %663 = vmatpush1.xpose.msra.mxu0 0.0
        %664 = vmatprep.subr.mxu0 0.0
        %665 = vmatpush1.xpose.msra.mxu0 0.0
        %666 = vmatprep.subr.mxu0 0.0
        %667 = vmatpush1.xpose.msra.mxu0 0.0
        %668 = vmatprep.subr.mxu0 0.0
        %669 = vmatpush1.xpose.msra.mxu0 0.0
        %670 = vmatprep.subr.mxu0 0.0
        %671 = vmatpush1.xpose.msra.mxu0 0.0
        %672 = vmatprep.subr.mxu0 0.0
        %673 = vmatpush1.xpose.msra.mxu0 0.0
        %674 = vmatprep.subr.mxu0 0.0
        %675 = vmatpush1.xpose.msra.mxu0 0.0
        %676 = vmatprep.subr.mxu0 0.0
        %677 = vmatpush1.xpose.msra.mxu0 0.0
        %678 = vmatprep.subr.mxu0 0.0
        %679 = vmatpush1.xpose.msra.mxu0 0.0
        %680 = vmatprep.subr.mxu0 0.0
        %681 = vmatpush1.xpose.msra.mxu0 0.0
        %682 = vmatprep.subr.mxu0 0.0
        %683 = vmatpush1.xpose.msra.mxu0 0.0
        %684 = vmatprep.subr.mxu0 0.0
        %685 = vmatpush1.xpose.msra.mxu0 0.0
        %686 = vmatprep.subr.mxu0 0.0
        %687 = vmatpush1.xpose.msra.mxu0 0.0
        %688 = vmatprep.subr.mxu0 0.0
        %689 = vmatpush1.xpose.msra.mxu0 0.0
        %690 = vmatprep.subr.mxu0 0.0
        %691 = vmatpush1.xpose.msra.mxu0 0.0
        %692 = vmatprep.subr.mxu0 0.0
        %693 = vmatpush1.xpose.msra.mxu0 0.0
        %694 = vmatprep.subr.mxu0 0.0
        %695 = vmatpush1.xpose.msra.mxu0 0.0
        %696 = vmatprep.subr.mxu0 0.0
        %697 = vmatpush1.xpose.msra.mxu0 0.0
        %698 = vmatprep.subr.mxu0 0.0
        %699 = vmatpush1.xpose.msra.mxu0 0.0
        %700 = vmatprep.subr.mxu0 0.0
        %701 = vmatpush1.xpose.msra.mxu0 0.0
        %702 = vmatprep.subr.mxu0 0.0
        %703 = vmatpush1.xpose.msra.mxu0 0.0
        %704 = vmatprep.subr.mxu0 0.0
        %705 = vmatpush1.xpose.msra.mxu0 0.0
        %706 = vmatprep.subr.mxu0 0.0
        %707 = vmatpush1.xpose.msra.mxu0 0.0
        %708 = vmatprep.subr.mxu0 0.0
        %709 = vmatpush1.xpose.msra.mxu0 0.0
        %710 = vmatprep.subr.mxu0 0.0
        %711 = vmatpush1.xpose.msra.mxu0 0.0
        %712 = vmatprep.mubr.f32.mxu0 0.0
        %713 = vmatmul.mubr.f32.gmra.mrb[0].mxu0 %v634
        %v714 = vpop.f32.mrb[0].mxu0
        %v715 = vadd.f32 0.0, %v714
        %v716 = vpop.f32.mrb[0].mxu0
        %717 = vdwg.mxu0
        %v718 = vld [vmem:[#allocation13] sm:$0xff]
        %v719 = vld [vmem:[#allocation13 + $0x8] sm:$0xff]
        %v720 = vld [vmem:[#allocation13 + $0x10] sm:$0xff]
        %v721 = vld [vmem:[#allocation13 + $0x18] sm:$0xff]
        %v723 = vsel %vm543, %v530, 0
        %v726 = vsel %vm543, %v718, 0
        %v729 = vsel %vm543, %v719, 0
        %v732 = vsel %vm543, %v720, 0
        %v735 = vsel %vm543, %v721, 0
        %737 = vmatprep.subr.mxu0 0.0
        %738 = vmatpush1.xpose.msra.mxu0 %v726
        %739 = vmatprep.subr.mxu0 0.0
        %740 = vmatpush1.xpose.msra.mxu0 %v729
        %741 = vmatprep.subr.mxu0 0.0
        %742 = vmatpush1.xpose.msra.mxu0 %v732
        %743 = vmatprep.subr.mxu0 0.0
        %744 = vmatpush1.xpose.msra.mxu0 %v735
        %745 = vmatprep.subr.mxu0 0.0
        %746 = vmatpush1.xpose.msra.mxu0 0.0
        %747 = vmatprep.subr.mxu0 0.0
        %748 = vmatpush1.xpose.msra.mxu0 0.0
        %749 = vmatprep.subr.mxu0 0.0
        %750 = vmatpush1.xpose.msra.mxu0 0.0
        %751 = vmatprep.subr.mxu0 0.0
        %752 = vmatpush1.xpose.msra.mxu0 0.0
        %753 = vmatprep.subr.mxu0 0.0
        %754 = vmatpush1.xpose.msra.mxu0 0.0
        %755 = vmatprep.subr.mxu0 0.0
        %756 = vmatpush1.xpose.msra.mxu0 0.0
        %757 = vmatprep.subr.mxu0 0.0
        %758 = vmatpush1.xpose.msra.mxu0 0.0
        %759 = vmatprep.subr.mxu0 0.0
        %760 = vmatpush1.xpose.msra.mxu0 0.0
        %761 = vmatprep.subr.mxu0 0.0
        %762 = vmatpush1.xpose.msra.mxu0 0.0
        %763 = vmatprep.subr.mxu0 0.0
        %764 = vmatpush1.xpose.msra.mxu0 0.0
        %765 = vmatprep.subr.mxu0 0.0
        %766 = vmatpush1.xpose.msra.mxu0 0.0
        %767 = vmatprep.subr.mxu0 0.0
        %768 = vmatpush1.xpose.msra.mxu0 0.0
        %769 = vmatprep.subr.mxu0 0.0
        %770 = vmatpush1.xpose.msra.mxu0 0.0
        %771 = vmatprep.subr.mxu0 0.0
        %772 = vmatpush1.xpose.msra.mxu0 0.0
        %773 = vmatprep.subr.mxu0 0.0
        %774 = vmatpush1.xpose.msra.mxu0 0.0
        %775 = vmatprep.subr.mxu0 0.0
        %776 = vmatpush1.xpose.msra.mxu0 0.0
        %777 = vmatprep.subr.mxu0 0.0
        %778 = vmatpush1.xpose.msra.mxu0 0.0
        %779 = vmatprep.subr.mxu0 0.0
        %780 = vmatpush1.xpose.msra.mxu0 0.0
        %781 = vmatprep.subr.mxu0 0.0
        %782 = vmatpush1.xpose.msra.mxu0 0.0
        %783 = vmatprep.subr.mxu0 0.0
        %784 = vmatpush1.xpose.msra.mxu0 0.0
        %785 = vmatprep.subr.mxu0 0.0
        %786 = vmatpush1.xpose.msra.mxu0 0.0
        %787 = vmatprep.subr.mxu0 0.0
        %788 = vmatpush1.xpose.msra.mxu0 0.0
        %789 = vmatprep.subr.mxu0 0.0
        %790 = vmatpush1.xpose.msra.mxu0 0.0
        %791 = vmatprep.subr.mxu0 0.0
        %792 = vmatpush1.xpose.msra.mxu0 0.0
        %793 = vmatprep.subr.mxu0 0.0
        %794 = vmatpush1.xpose.msra.mxu0 0.0
        %795 = vmatprep.subr.mxu0 0.0
        %796 = vmatpush1.xpose.msra.mxu0 0.0
        %797 = vmatprep.subr.mxu0 0.0
        %798 = vmatpush1.xpose.msra.mxu0 0.0
        %799 = vmatprep.subr.mxu0 0.0
        %800 = vmatpush1.xpose.msra.mxu0 0.0
        %801 = vmatprep.mubr.f32.mxu0 0.0
        %802 = vmatmul.mubr.f32.gmra.mrb[0].mxu0 %v723
        %v803 = vpop.f32.mrb[0].mxu0
        %v804 = vadd.f32 0.0, %v803
        %v805 = vpop.f32.mrb[0].mxu0
        %806 = vdwg.mxu0
        %vm807 = vcmask 64512
        %v809 = vsel %vm807, %v626, 0
        %v812 = vsel %vm807, %v715, 0
        %814 = vmatprep.subr.mxu0 0.0
        %815 = vmatpush1.xpose.msra.mxu0 %v812
        %816 = vmatprep.subr.mxu0 0.0
        %817 = vmatpush1.xpose.msra.mxu0 0.0
        %818 = vmatprep.subr.mxu0 0.0
        %819 = vmatpush1.xpose.msra.mxu0 0.0
        %820 = vmatprep.subr.mxu0 0.0
        %821 = vmatpush1.xpose.msra.mxu0 0.0
        %822 = vmatprep.subr.mxu0 0.0
        %823 = vmatpush1.xpose.msra.mxu0 0.0
        %824 = vmatprep.subr.mxu0 0.0
        %825 = vmatpush1.xpose.msra.mxu0 0.0
        %826 = vmatprep.subr.mxu0 0.0
        %827 = vmatpush1.xpose.msra.mxu0 0.0
        %828 = vmatprep.subr.mxu0 0.0
        %829 = vmatpush1.xpose.msra.mxu0 0.0
        %830 = vmatprep.subr.mxu0 0.0
        %831 = vmatpush1.xpose.msra.mxu0 0.0
        %832 = vmatprep.subr.mxu0 0.0
        %833 = vmatpush1.xpose.msra.mxu0 0.0
        %834 = vmatprep.subr.mxu0 0.0
        %835 = vmatpush1.xpose.msra.mxu0 0.0
        %836 = vmatprep.subr.mxu0 0.0
        %837 = vmatpush1.xpose.msra.mxu0 0.0
        %838 = vmatprep.subr.mxu0 0.0
        %839 = vmatpush1.xpose.msra.mxu0 0.0
        %840 = vmatprep.subr.mxu0 0.0
        %841 = vmatpush1.xpose.msra.mxu0 0.0
        %842 = vmatprep.subr.mxu0 0.0
        %843 = vmatpush1.xpose.msra.mxu0 0.0
        %844 = vmatprep.subr.mxu0 0.0
        %845 = vmatpush1.xpose.msra.mxu0 0.0
        %846 = vmatprep.subr.mxu0 0.0
        %847 = vmatpush1.xpose.msra.mxu0 0.0
        %848 = vmatprep.subr.mxu0 0.0
        %849 = vmatpush1.xpose.msra.mxu0 0.0
        %850 = vmatprep.subr.mxu0 0.0
        %851 = vmatpush1.xpose.msra.mxu0 0.0
        %852 = vmatprep.subr.mxu0 0.0
        %853 = vmatpush1.xpose.msra.mxu0 0.0
        %854 = vmatprep.subr.mxu0 0.0
        %855 = vmatpush1.xpose.msra.mxu0 0.0
        %856 = vmatprep.subr.mxu0 0.0
        %857 = vmatpush1.xpose.msra.mxu0 0.0
        %858 = vmatprep.subr.mxu0 0.0
        %859 = vmatpush1.xpose.msra.mxu0 0.0
        %860 = vmatprep.subr.mxu0 0.0
        %861 = vmatpush1.xpose.msra.mxu0 0.0
        %862 = vmatprep.subr.mxu0 0.0
        %863 = vmatpush1.xpose.msra.mxu0 0.0
        %864 = vmatprep.subr.mxu0 0.0
        %865 = vmatpush1.xpose.msra.mxu0 0.0
        %866 = vmatprep.subr.mxu0 0.0
        %867 = vmatpush1.xpose.msra.mxu0 0.0
        %868 = vmatprep.subr.mxu0 0.0
        %869 = vmatpush1.xpose.msra.mxu0 0.0
        %870 = vmatprep.subr.mxu0 0.0
        %871 = vmatpush1.xpose.msra.mxu0 0.0
        %872 = vmatprep.subr.mxu0 0.0
        %873 = vmatpush1.xpose.msra.mxu0 0.0
        %874 = vmatprep.subr.mxu0 0.0
        %875 = vmatpush1.xpose.msra.mxu0 0.0
        %876 = vmatprep.subr.mxu0 0.0
        %877 = vmatpush1.xpose.msra.mxu0 0.0
        %878 = vmatprep.mubr.f32.mxu0 0.0
        %879 = vmatmul.mubr.f32.gmra.mrb[0].mxu0 %v809
        %v880 = vpop.f32.mrb[0].mxu0
        %v881 = vadd.f32 0.0, %v880
        %v882 = vpop.f32.mrb[0].mxu0
        %883 = vdwg.mxu0
        %v884 = vmul.f32 %v881, 0.35355338
        %v885 = vadd.f32 %v884, %v531
        %886 = vst.msk [vmem:[%s527] sm:$0xff] %vm807, %v885
        %v887 = vsel %vm807, %v885, -inf
        %v888 = vrot.slane %v887, 4
        %v889 = vmax.f32 %v887, %v888
        %v890 = vrot.slane %v889, 2
        %v891 = vmax.f32 %v889, %v890
        %v892 = vrot.slane %v891, 1
        %v893 = vmax.f32 %v891, %v892
        %v894 = vsub.f32 %v885, %v893
        %v895 = vmul.f32 %v894, 1.442695
        %v896 = vpow.pop %v895
        %v897 = vsel %vm807, %v896, 0.0
        %v898 = vrot.slane %v897, 4
        %v899 = vadd.f32 %v897, %v898
        %v900 = vrot.slane %v899, 2
        %v901 = vadd.f32 %v899, %v900
        %v902 = vrot.slane %v901, 1
        %v903 = vadd.f32 %v901, %v902
        %v904 = vrcp.pop %v903
        %v905 = vmul.f32 %v896, %v904
        %v907 = vsel %vm807, %v905, 0
        %909 = vmatprep.subr.mxu0 0.0
        %910 = vmatpush1.msra.mxu0 %v804
        %911 = vmatprep.subr.mxu0 0.0
        %912 = vmatpush1.msra.mxu0 0.0
        %913 = vmatprep.subr.mxu0 0.0
        %914 = vmatpush1.msra.mxu0 0.0
        %915 = vmatprep.subr.mxu0 0.0
        %916 = vmatpush1.msra.mxu0 0.0
        %917 = vmatprep.subr.mxu0 0.0
        %918 = vmatpush1.msra.mxu0 0.0
        %919 = vmatprep.subr.mxu0 0.0
        %920 = vmatpush1.msra.mxu0 0.0
        %921 = vmatprep.subr.mxu0 0.0
        %922 = vmatpush1.msra.mxu0 0.0
        %923 = vmatprep.subr.mxu0 0.0
        %924 = vmatpush1.msra.mxu0 0.0
        %925 = vmatprep.subr.mxu0 0.0
        %926 = vmatpush1.msra.mxu0 0.0
        %927 = vmatprep.subr.mxu0 0.0
        %928 = vmatpush1.msra.mxu0 0.0
        %929 = vmatprep.subr.mxu0 0.0
        %930 = vmatpush1.msra.mxu0 0.0
        %931 = vmatprep.subr.mxu0 0.0
        %932 = vmatpush1.msra.mxu0 0.0
        %933 = vmatprep.subr.mxu0 0.0
        %934 = vmatpush1.msra.mxu0 0.0
        %935 = vmatprep.subr.mxu0 0.0
        %936 = vmatpush1.msra.mxu0 0.0
        %937 = vmatprep.subr.mxu0 0.0
        %938 = vmatpush1.msra.mxu0 0.0
        %939 = vmatprep.subr.mxu0 0.0
        %940 = vmatpush1.msra.mxu0 0.0
        %941 = vmatprep.subr.mxu0 0.0
        %942 = vmatpush1.msra.mxu0 0.0
        %943 = vmatprep.subr.mxu0 0.0
        %944 = vmatpush1.msra.mxu0 0.0
        %945 = vmatprep.subr.mxu0 0.0
        %946 = vmatpush1.msra.mxu0 0.0
        %947 = vmatprep.subr.mxu0 0.0
        %948 = vmatpush1.msra.mxu0 0.0
        %949 = vmatprep.subr.mxu0 0.0
        %950 = vmatpush1.msra.mxu0 0.0
        %951 = vmatprep.subr.mxu0 0.0
        %952 = vmatpush1.msra.mxu0 0.0
        %953 = vmatprep.subr.mxu0 0.0
        %954 = vmatpush1.msra.mxu0 0.0
        %955 = vmatprep.subr.mxu0 0.0
        %956 = vmatpush1.msra.mxu0 0.0
        %957 = vmatprep.subr.mxu0 0.0
        %958 = vmatpush1.msra.mxu0 0.0
        %959 = vmatprep.subr.mxu0 0.0
        %960 = vmatpush1.msra.mxu0 0.0
        %961 = vmatprep.subr.mxu0 0.0
        %962 = vmatpush1.msra.mxu0 0.0
        %963 = vmatprep.subr.mxu0 0.0
        %964 = vmatpush1.msra.mxu0 0.0
        %965 = vmatprep.subr.mxu0 0.0
        %966 = vmatpush1.msra.mxu0 0.0
        %967 = vmatprep.subr.mxu0 0.0
        %968 = vmatpush1.msra.mxu0 0.0
        %969 = vmatprep.subr.mxu0 0.0
        %970 = vmatpush1.msra.mxu0 0.0
        %971 = vmatprep.subr.mxu0 0.0
        %972 = vmatpush1.msra.mxu0 0.0
        %973 = vmatprep.mubr.f32.mxu0 0.0
        %974 = vmatmul.mubr.f32.gmra.mrb[0].mxu0 %v907
        %v975 = vpop.f32.mrb[0].mxu0
        %v976 = vadd.f32 0.0, %v975
        %v977 = vpop.f32.mrb[0].mxu0
        %978 = vdwg.mxu0
        %v980 = vsel %vm807, %v976, 0
        %v983 = vsel %vm807, %v535, 0
        %v986 = vsel %vm807, %v536, 0
        %v989 = vsel %vm807, %v537, 0
        %v992 = vsel %vm807, %v538, 0
        %994 = vmatprep.subr.mxu0 0.0
        %995 = vmatpush1.xpose.msra.mxu0 %v983
        %996 = vmatprep.subr.mxu0 0.0
        %997 = vmatpush1.xpose.msra.mxu0 %v986
        %998 = vmatprep.subr.mxu0 0.0
        %999 = vmatpush1.xpose.msra.mxu0 %v989
        %1000 = vmatprep.subr.mxu0 0.0
        %1001 = vmatpush1.xpose.msra.mxu0 %v992
        %1002 = vmatprep.subr.mxu0 0.0
        %1003 = vmatpush1.xpose.msra.mxu0 0.0
        %1004 = vmatprep.subr.mxu0 0.0
        %1005 = vmatpush1.xpose.msra.mxu0 0.0
        %1006 = vmatprep.subr.mxu0 0.0
        %1007 = vmatpush1.xpose.msra.mxu0 0.0
        %1008 = vmatprep.subr.mxu0 0.0
        %1009 = vmatpush1.xpose.msra.mxu0 0.0
        %1010 = vmatprep.subr.mxu0 0.0
        %1011 = vmatpush1.xpose.msra.mxu0 0.0
        %1012 = vmatprep.subr.mxu0 0.0
        %1013 = vmatpush1.xpose.msra.mxu0 0.0
        %1014 = vmatprep.subr.mxu0 0.0
        %1015 = vmatpush1.xpose.msra.mxu0 0.0
        %1016 = vmatprep.subr.mxu0 0.0
        %1017 = vmatpush1.xpose.msra.mxu0 0.0
        %1018 = vmatprep.subr.mxu0 0.0
        %1019 = vmatpush1.xpose.msra.mxu0 0.0
        %1020 = vmatprep.subr.mxu0 0.0
        %1021 = vmatpush1.xpose.msra.mxu0 0.0
        %1022 = vmatprep.subr.mxu0 0.0
        %1023 = vmatpush1.xpose.msra.mxu0 0.0
        %1024 = vmatprep.subr.mxu0 0.0
        %1025 = vmatpush1.xpose.msra.mxu0 0.0
        %1026 = vmatprep.subr.mxu0 0.0
        %1027 = vmatpush1.xpose.msra.mxu0 0.0
        %1028 = vmatprep.subr.mxu0 0.0
        %1029 = vmatpush1.xpose.msra.mxu0 0.0
        %1030 = vmatprep.subr.mxu0 0.0
        %1031 = vmatpush1.xpose.msra.mxu0 0.0
        %1032 = vmatprep.subr.mxu0 0.0
        %1033 = vmatpush1.xpose.msra.mxu0 0.0
        %1034 = vmatprep.subr.mxu0 0.0
        %1035 = vmatpush1.xpose.msra.mxu0 0.0
        %1036 = vmatprep.subr.mxu0 0.0
        %1037 = vmatpush1.xpose.msra.mxu0 0.0
        %1038 = vmatprep.subr.mxu0 0.0
        %1039 = vmatpush1.xpose.msra.mxu0 0.0
        %1040 = vmatprep.subr.mxu0 0.0
        %1041 = vmatpush1.xpose.msra.mxu0 0.0
        %1042 = vmatprep.subr.mxu0 0.0
        %1043 = vmatpush1.xpose.msra.mxu0 0.0
        %1044 = vmatprep.subr.mxu0 0.0
        %1045 = vmatpush1.xpose.msra.mxu0 0.0
        %1046 = vmatprep.subr.mxu0 0.0
        %1047 = vmatpush1.xpose.msra.mxu0 0.0
        %1048 = vmatprep.subr.mxu0 0.0
        %1049 = vmatpush1.xpose.msra.mxu0 0.0
        %1050 = vmatprep.subr.mxu0 0.0
        %1051 = vmatpush1.xpose.msra.mxu0 0.0
        %1052 = vmatprep.subr.mxu0 0.0
        %1053 = vmatpush1.xpose.msra.mxu0 0.0
        %1054 = vmatprep.subr.mxu0 0.0
        %1055 = vmatpush1.xpose.msra.mxu0 0.0
        %1056 = vmatprep.subr.mxu0 0.0
        %1057 = vmatpush1.xpose.msra.mxu0 0.0
        %1058 = vmatprep.mubr.f32.mxu0 0.0
        %1059 = vmatmul.mubr.f32.gmra.mrb[0].mxu0 %v980
        %v1060 = vpop.f32.mrb[0].mxu0
        %v1061 = vadd.f32 0.0, %v1060
        %v1062 = vpop.f32.mrb[0].mxu0
        %1063 = vdwg.mxu0
        %v1064 = vadd.f32 %v528, %v1061
        %1065 = vrot.lane.b32.xlu0 %v626, 120
        %v1066 = vpop.permute.xlu0 %1065
        %1067 = vrot.lane.b32.xlu0 %v715, 120
        %v1068 = vpop.permute.xlu0 %1067
        %v1069 = vsel %vm807, %v1066, 0
        %v1071 = vsel %vm807, %v1068, 0
        %1073 = vmatprep.subr.mxu0 0.0
        %1074 = vmatpush1.xpose.msra.mxu0 %v1071
        %1075 = vmatprep.subr.mxu0 0.0
        %1076 = vmatpush1.xpose.msra.mxu0 0.0
        %1077 = vmatprep.subr.mxu0 0.0
        %1078 = vmatpush1.xpose.msra.mxu0 0.0
        %1079 = vmatprep.subr.mxu0 0.0
        %1080 = vmatpush1.xpose.msra.mxu0 0.0
        %1081 = vmatprep.subr.mxu0 0.0
        %1082 = vmatpush1.xpose.msra.mxu0 0.0
        %1083 = vmatprep.subr.mxu0 0.0
        %1084 = vmatpush1.xpose.msra.mxu0 0.0
        %1085 = vmatprep.subr.mxu0 0.0
        %1086 = vmatpush1.xpose.msra.mxu0 0.0
        %1087 = vmatprep.subr.mxu0 0.0
        %1088 = vmatpush1.xpose.msra.mxu0 0.0
        %1089 = vmatprep.subr.mxu0 0.0
        %1090 = vmatpush1.xpose.msra.mxu0 0.0
        %1091 = vmatprep.subr.mxu0 0.0
        %1092 = vmatpush1.xpose.msra.mxu0 0.0
        %1093 = vmatprep.subr.mxu0 0.0
        %1094 = vmatpush1.xpose.msra.mxu0 0.0
        %1095 = vmatprep.subr.mxu0 0.0
        %1096 = vmatpush1.xpose.msra.mxu0 0.0
        %1097 = vmatprep.subr.mxu0 0.0
        %1098 = vmatpush1.xpose.msra.mxu0 0.0
        %1099 = vmatprep.subr.mxu0 0.0
        %1100 = vmatpush1.xpose.msra.mxu0 0.0
        %1101 = vmatprep.subr.mxu0 0.0
        %1102 = vmatpush1.xpose.msra.mxu0 0.0
        %1103 = vmatprep.subr.mxu0 0.0
        %1104 = vmatpush1.xpose.msra.mxu0 0.0
        %1105 = vmatprep.subr.mxu0 0.0
        %1106 = vmatpush1.xpose.msra.mxu0 0.0
        %1107 = vmatprep.subr.mxu0 0.0
        %1108 = vmatpush1.xpose.msra.mxu0 0.0
        %1109 = vmatprep.subr.mxu0 0.0
        %1110 = vmatpush1.xpose.msra.mxu0 0.0
        %1111 = vmatprep.subr.mxu0 0.0
        %1112 = vmatpush1.xpose.msra.mxu0 0.0
        %1113 = vmatprep.subr.mxu0 0.0
        %1114 = vmatpush1.xpose.msra.mxu0 0.0
        %1115 = vmatprep.subr.mxu0 0.0
        %1116 = vmatpush1.xpose.msra.mxu0 0.0
        %1117 = vmatprep.subr.mxu0 0.0
        %1118 = vmatpush1.xpose.msra.mxu0 0.0
        %1119 = vmatprep.subr.mxu0 0.0
        %1120 = vmatpush1.xpose.msra.mxu0 0.0
        %1121 = vmatprep.subr.mxu0 0.0
        %1122 = vmatpush1.xpose.msra.mxu0 0.0
        %1123 = vmatprep.subr.mxu0 0.0
        %1124 = vmatpush1.xpose.msra.mxu0 0.0
        %1125 = vmatprep.subr.mxu0 0.0
        %1126 = vmatpush1.xpose.msra.mxu0 0.0
        %1127 = vmatprep.subr.mxu0 0.0
        %1128 = vmatpush1.xpose.msra.mxu0 0.0
        %1129 = vmatprep.subr.mxu0 0.0
        %1130 = vmatpush1.xpose.msra.mxu0 0.0
        %1131 = vmatprep.subr.mxu0 0.0
        %1132 = vmatpush1.xpose.msra.mxu0 0.0
        %1133 = vmatprep.subr.mxu0 0.0
        %1134 = vmatpush1.xpose.msra.mxu0 0.0
        %1135 = vmatprep.subr.mxu0 0.0
        %1136 = vmatpush1.xpose.msra.mxu0 0.0
        %1137 = vmatprep.mubr.f32.mxu0 0.0
        %1138 = vmatmul.mubr.f32.gmra.mrb[0].mxu0 %v1069
        %v1139 = vpop.f32.mrb[0].mxu0
        %v1140 = vadd.f32 0.0, %v1139
        %v1141 = vpop.f32.mrb[0].mxu0
        %1142 = vdwg.mxu0
        %v1143 = vmul.f32 %v1140, 0.35355338
        %v1144 = vadd.f32 %v1143, %v532
        %s1145 = scalar_lea.vmem %s527, 8 [#allocation17]
        %1146 = vst.msk [vmem:[%s1145] sm:$0xff] %vm807, %v1144
        %v1147 = vsel %vm807, %v1144, -inf
        %v1148 = vrot.slane %v1147, 4
        %v1149 = vmax.f32 %v1147, %v1148
        %v1150 = vrot.slane %v1149, 2
        %v1151 = vmax.f32 %v1149, %v1150
        %v1152 = vrot.slane %v1151, 1
        %v1153 = vmax.f32 %v1151, %v1152
        %v1154 = vsub.f32 %v1144, %v1153
        %v1155 = vmul.f32 %v1154, 1.442695
        %v1156 = vpow.pop %v1155
        %v1157 = vsel %vm807, %v1156, 0.0
        %v1158 = vrot.slane %v1157, 4
        %v1159 = vadd.f32 %v1157, %v1158
        %v1160 = vrot.slane %v1159, 2
        %v1161 = vadd.f32 %v1159, %v1160
        %v1162 = vrot.slane %v1161, 1
        %v1163 = vadd.f32 %v1161, %v1162
        %v1164 = vrcp.pop %v1163
        %v1165 = vmul.f32 %v1156, %v1164
        %1167 = vrot.lane.b32.xlu0 %v804, 120
        %v1168 = vpop.permute.xlu0 %1167
        %v1171 = vsel %vm807, %v1165, 0
        %1173 = vmatprep.subr.mxu0 0.0
        %1174 = vmatpush1.msra.mxu0 %v1168
        %1175 = vmatprep.subr.mxu0 0.0
        %1176 = vmatpush1.msra.mxu0 0.0
        %1177 = vmatprep.subr.mxu0 0.0
        %1178 = vmatpush1.msra.mxu0 0.0
        %1179 = vmatprep.subr.mxu0 0.0
        %1180 = vmatpush1.msra.mxu0 0.0
        %1181 = vmatprep.subr.mxu0 0.0
        %1182 = vmatpush1.msra.mxu0 0.0
        %1183 = vmatprep.subr.mxu0 0.0
        %1184 = vmatpush1.msra.mxu0 0.0
        %1185 = vmatprep.subr.mxu0 0.0
        %1186 = vmatpush1.msra.mxu0 0.0
        %1187 = vmatprep.subr.mxu0 0.0
        %1188 = vmatpush1.msra.mxu0 0.0
        %1189 = vmatprep.subr.mxu0 0.0
        %1190 = vmatpush1.msra.mxu0 0.0
        %1191 = vmatprep.subr.mxu0 0.0
        %1192 = vmatpush1.msra.mxu0 0.0
        %1193 = vmatprep.subr.mxu0 0.0
        %1194 = vmatpush1.msra.mxu0 0.0
        %1195 = vmatprep.subr.mxu0 0.0
        %1196 = vmatpush1.msra.mxu0 0.0
        %1197 = vmatprep.subr.mxu0 0.0
        %1198 = vmatpush1.msra.mxu0 0.0
        %1199 = vmatprep.subr.mxu0 0.0
        %1200 = vmatpush1.msra.mxu0 0.0
        %1201 = vmatprep.subr.mxu0 0.0
        %1202 = vmatpush1.msra.mxu0 0.0
        %1203 = vmatprep.subr.mxu0 0.0
        %1204 = vmatpush1.msra.mxu0 0.0
        %1205 = vmatprep.subr.mxu0 0.0
        %1206 = vmatpush1.msra.mxu0 0.0
        %1207 = vmatprep.subr.mxu0 0.0
        %1208 = vmatpush1.msra.mxu0 0.0
        %1209 = vmatprep.subr.mxu0 0.0
        %1210 = vmatpush1.msra.mxu0 0.0
        %1211 = vmatprep.subr.mxu0 0.0
        %1212 = vmatpush1.msra.mxu0 0.0
        %1213 = vmatprep.subr.mxu0 0.0
        %1214 = vmatpush1.msra.mxu0 0.0
        %1215 = vmatprep.subr.mxu0 0.0
        %1216 = vmatpush1.msra.mxu0 0.0
        %1217 = vmatprep.subr.mxu0 0.0
        %1218 = vmatpush1.msra.mxu0 0.0
        %1219 = vmatprep.subr.mxu0 0.0
        %1220 = vmatpush1.msra.mxu0 0.0
        %1221 = vmatprep.subr.mxu0 0.0
        %1222 = vmatpush1.msra.mxu0 0.0
        %1223 = vmatprep.subr.mxu0 0.0
        %1224 = vmatpush1.msra.mxu0 0.0
        %1225 = vmatprep.subr.mxu0 0.0
        %1226 = vmatpush1.msra.mxu0 0.0
        %1227 = vmatprep.subr.mxu0 0.0
        %1228 = vmatpush1.msra.mxu0 0.0
        %1229 = vmatprep.subr.mxu0 0.0
        %1230 = vmatpush1.msra.mxu0 0.0
        %1231 = vmatprep.subr.mxu0 0.0
        %1232 = vmatpush1.msra.mxu0 0.0
        %1233 = vmatprep.subr.mxu0 0.0
        %1234 = vmatpush1.msra.mxu0 0.0
        %1235 = vmatprep.subr.mxu0 0.0
        %1236 = vmatpush1.msra.mxu0 0.0
        %1237 = vmatprep.mubr.f32.mxu0 0.0
        %1238 = vmatmul.mubr.f32.gmra.mrb[0].mxu0 %v1171
        %v1239 = vpop.f32.mrb[0].mxu0
        %v1240 = vadd.f32 0.0, %v1239
        %v1241 = vpop.f32.mrb[0].mxu0
        %1242 = vdwg.mxu0
        %1243 = vrot.lane.b32.xlu0 %v535, 120
        %v1244 = vpop.permute.xlu0 %1243
        %1245 = vrot.lane.b32.xlu0 %v536, 120
        %v1246 = vpop.permute.xlu0 %1245
        %1247 = vrot.lane.b32.xlu0 %v537, 120
        %v1248 = vpop.permute.xlu0 %1247
        %1249 = vrot.lane.b32.xlu0 %v538, 120
        %v1250 = vpop.permute.xlu0 %1249
        %v1252 = vsel %vm807, %v1240, 0
        %v1254 = vsel %vm807, %v1244, 0
        %v1256 = vsel %vm807, %v1246, 0
        %v1258 = vsel %vm807, %v1248, 0
        %v1260 = vsel %vm807, %v1250, 0
        %1262 = vmatprep.subr.mxu0 0.0
        %1263 = vmatpush1.xpose.msra.mxu0 %v1254
        %1264 = vmatprep.subr.mxu0 0.0
        %1265 = vmatpush1.xpose.msra.mxu0 %v1256
        %1266 = vmatprep.subr.mxu0 0.0
        %1267 = vmatpush1.xpose.msra.mxu0 %v1258
        %1268 = vmatprep.subr.mxu0 0.0
        %1269 = vmatpush1.xpose.msra.mxu0 %v1260
        %1270 = vmatprep.subr.mxu0 0.0
        %1271 = vmatpush1.xpose.msra.mxu0 0.0
        %1272 = vmatprep.subr.mxu0 0.0
        %1273 = vmatpush1.xpose.msra.mxu0 0.0
        %1274 = vmatprep.subr.mxu0 0.0
        %1275 = vmatpush1.xpose.msra.mxu0 0.0
        %1276 = vmatprep.subr.mxu0 0.0
        %1277 = vmatpush1.xpose.msra.mxu0 0.0
        %1278 = vmatprep.subr.mxu0 0.0
        %1279 = vmatpush1.xpose.msra.mxu0 0.0
        %1280 = vmatprep.subr.mxu0 0.0
        %1281 = vmatpush1.xpose.msra.mxu0 0.0
        %1282 = vmatprep.subr.mxu0 0.0
        %1283 = vmatpush1.xpose.msra.mxu0 0.0
        %1284 = vmatprep.subr.mxu0 0.0
        %1285 = vmatpush1.xpose.msra.mxu0 0.0
        %1286 = vmatprep.subr.mxu0 0.0
        %1287 = vmatpush1.xpose.msra.mxu0 0.0
        %1288 = vmatprep.subr.mxu0 0.0
        %1289 = vmatpush1.xpose.msra.mxu0 0.0
        %1290 = vmatprep.subr.mxu0 0.0
        %1291 = vmatpush1.xpose.msra.mxu0 0.0
        %1292 = vmatprep.subr.mxu0 0.0
        %1293 = vmatpush1.xpose.msra.mxu0 0.0
        %1294 = vmatprep.subr.mxu0 0.0
        %1295 = vmatpush1.xpose.msra.mxu0 0.0
        %1296 = vmatprep.subr.mxu0 0.0
        %1297 = vmatpush1.xpose.msra.mxu0 0.0
        %1298 = vmatprep.subr.mxu0 0.0
        %1299 = vmatpush1.xpose.msra.mxu0 0.0
        %1300 = vmatprep.subr.mxu0 0.0
        %1301 = vmatpush1.xpose.msra.mxu0 0.0
        %1302 = vmatprep.subr.mxu0 0.0
        %1303 = vmatpush1.xpose.msra.mxu0 0.0
        %1304 = vmatprep.subr.mxu0 0.0
        %1305 = vmatpush1.xpose.msra.mxu0 0.0
        %1306 = vmatprep.subr.mxu0 0.0
        %1307 = vmatpush1.xpose.msra.mxu0 0.0
        %1308 = vmatprep.subr.mxu0 0.0
        %1309 = vmatpush1.xpose.msra.mxu0 0.0
        %1310 = vmatprep.subr.mxu0 0.0
        %1311 = vmatpush1.xpose.msra.mxu0 0.0
        %1312 = vmatprep.subr.mxu0 0.0
        %1313 = vmatpush1.xpose.msra.mxu0 0.0
        %1314 = vmatprep.subr.mxu0 0.0
        %1315 = vmatpush1.xpose.msra.mxu0 0.0
        %1316 = vmatprep.subr.mxu0 0.0
        %1317 = vmatpush1.xpose.msra.mxu0 0.0
        %1318 = vmatprep.subr.mxu0 0.0
        %1319 = vmatpush1.xpose.msra.mxu0 0.0
        %1320 = vmatprep.subr.mxu0 0.0
        %1321 = vmatpush1.xpose.msra.mxu0 0.0
        %1322 = vmatprep.subr.mxu0 0.0
        %1323 = vmatpush1.xpose.msra.mxu0 0.0
        %1324 = vmatprep.subr.mxu0 0.0
        %1325 = vmatpush1.xpose.msra.mxu0 0.0
        %1326 = vmatprep.mubr.f32.mxu0 0.0
        %1327 = vmatmul.mubr.f32.gmra.mrb[0].mxu0 %v1252
        %v1328 = vpop.f32.mrb[0].mxu0
        %v1329 = vadd.f32 0.0, %v1328
        %v1330 = vpop.f32.mrb[0].mxu0
        %1331 = vdwg.mxu0
        %v1332 = vadd.f32 %v1064, %v1329
        %1333 = vrot.lane.b32.xlu0 %v626, 112
        %v1334 = vpop.permute.xlu0 %1333
        %1335 = vrot.lane.b32.xlu0 %v715, 112
        %v1336 = vpop.permute.xlu0 %1335
        %v1337 = vsel %vm807, %v1334, 0
        %v1339 = vsel %vm807, %v1336, 0
        %1341 = vmatprep.subr.mxu0 0.0
        %1342 = vmatpush1.xpose.msra.mxu0 %v1339
        %1343 = vmatprep.subr.mxu0 0.0
        %1344 = vmatpush1.xpose.msra.mxu0 0.0
        %1345 = vmatprep.subr.mxu0 0.0
        %1346 = vmatpush1.xpose.msra.mxu0 0.0
        %1347 = vmatprep.subr.mxu0 0.0
        %1348 = vmatpush1.xpose.msra.mxu0 0.0
        %1349 = vmatprep.subr.mxu0 0.0
        %1350 = vmatpush1.xpose.msra.mxu0 0.0
        %1351 = vmatprep.subr.mxu0 0.0
        %1352 = vmatpush1.xpose.msra.mxu0 0.0
        %1353 = vmatprep.subr.mxu0 0.0
        %1354 = vmatpush1.xpose.msra.mxu0 0.0
        %1355 = vmatprep.subr.mxu0 0.0
        %1356 = vmatpush1.xpose.msra.mxu0 0.0
        %1357 = vmatprep.subr.mxu0 0.0
        %1358 = vmatpush1.xpose.msra.mxu0 0.0
        %1359 = vmatprep.subr.mxu0 0.0
        %1360 = vmatpush1.xpose.msra.mxu0 0.0
        %1361 = vmatprep.subr.mxu0 0.0
        %1362 = vmatpush1.xpose.msra.mxu0 0.0
        %1363 = vmatprep.subr.mxu0 0.0
        %1364 = vmatpush1.xpose.msra.mxu0 0.0
        %1365 = vmatprep.subr.mxu0 0.0
        %1366 = vmatpush1.xpose.msra.mxu0 0.0
        %1367 = vmatprep.subr.mxu0 0.0
        %1368 = vmatpush1.xpose.msra.mxu0 0.0
        %1369 = vmatprep.subr.mxu0 0.0
        %1370 = vmatpush1.xpose.msra.mxu0 0.0
        %1371 = vmatprep.subr.mxu0 0.0
        %1372 = vmatpush1.xpose.msra.mxu0 0.0
        %1373 = vmatprep.subr.mxu0 0.0
        %1374 = vmatpush1.xpose.msra.mxu0 0.0
        %1375 = vmatprep.subr.mxu0 0.0
        %1376 = vmatpush1.xpose.msra.mxu0 0.0
        %1377 = vmatprep.subr.mxu0 0.0
        %1378 = vmatpush1.xpose.msra.mxu0 0.0
        %1379 = vmatprep.subr.mxu0 0.0
        %1380 = vmatpush1.xpose.msra.mxu0 0.0
        %1381 = vmatprep.subr.mxu0 0.0
        %1382 = vmatpush1.xpose.msra.mxu0 0.0
        %1383 = vmatprep.subr.mxu0 0.0
        %1384 = vmatpush1.xpose.msra.mxu0 0.0
        %1385 = vmatprep.subr.mxu0 0.0
        %1386 = vmatpush1.xpose.msra.mxu0 0.0
        %1387 = vmatprep.subr.mxu0 0.0
        %1388 = vmatpush1.xpose.msra.mxu0 0.0
        %1389 = vmatprep.subr.mxu0 0.0
        %1390 = vmatpush1.xpose.msra.mxu0 0.0
        %1391 = vmatprep.subr.mxu0 0.0
        %1392 = vmatpush1.xpose.msra.mxu0 0.0
        %1393 = vmatprep.subr.mxu0 0.0
        %1394 = vmatpush1.xpose.msra.mxu0 0.0
        %1395 = vmatprep.subr.mxu0 0.0
        %1396 = vmatpush1.xpose.msra.mxu0 0.0
        %1397 = vmatprep.subr.mxu0 0.0
        %1398 = vmatpush1.xpose.msra.mxu0 0.0
        %1399 = vmatprep.subr.mxu0 0.0
        %1400 = vmatpush1.xpose.msra.mxu0 0.0
        %1401 = vmatprep.subr.mxu0 0.0
        %1402 = vmatpush1.xpose.msra.mxu0 0.0
        %1403 = vmatprep.subr.mxu0 0.0
        %1404 = vmatpush1.xpose.msra.mxu0 0.0
        %1405 = vmatprep.mubr.f32.mxu0 0.0
        %1406 = vmatmul.mubr.f32.gmra.mrb[0].mxu0 %v1337
        %v1407 = vpop.f32.mrb[0].mxu0
        %v1408 = vadd.f32 0.0, %v1407
        %v1409 = vpop.f32.mrb[0].mxu0
        %1410 = vdwg.mxu0
        %v1411 = vmul.f32 %v1408, 0.35355338
        %v1412 = vadd.f32 %v1411, %v533
        %s1413 = scalar_lea.vmem %s527, 16 [#allocation17]
        %1414 = vst.msk [vmem:[%s1413] sm:$0xff] %vm807, %v1412
        %v1415 = vsel %vm807, %v1412, -inf
        %v1416 = vrot.slane %v1415, 4
        %v1417 = vmax.f32 %v1415, %v1416
        %v1418 = vrot.slane %v1417, 2
        %v1419 = vmax.f32 %v1417, %v1418
        %v1420 = vrot.slane %v1419, 1
        %v1421 = vmax.f32 %v1419, %v1420
        %v1422 = vsub.f32 %v1412, %v1421
        %v1423 = vmul.f32 %v1422, 1.442695
        %v1424 = vpow.pop %v1423
        %v1425 = vsel %vm807, %v1424, 0.0
        %v1426 = vrot.slane %v1425, 4
        %v1427 = vadd.f32 %v1425, %v1426
        %v1428 = vrot.slane %v1427, 2
        %v1429 = vadd.f32 %v1427, %v1428
        %v1430 = vrot.slane %v1429, 1
        %v1431 = vadd.f32 %v1429, %v1430
        %v1432 = vrcp.pop %v1431
        %v1433 = vmul.f32 %v1424, %v1432
        %1434 = vrot.lane.b32.xlu0 %v804, 112
        %v1435 = vpop.permute.xlu0 %1434
        %v1438 = vsel %vm807, %v1433, 0
        %1440 = vmatprep.subr.mxu0 0.0
        %1441 = vmatpush1.msra.mxu0 %v1435
        %1442 = vmatprep.subr.mxu0 0.0
        %1443 = vmatpush1.msra.mxu0 0.0
        %1444 = vmatprep.subr.mxu0 0.0
        %1445 = vmatpush1.msra.mxu0 0.0
        %1446 = vmatprep.subr.mxu0 0.0
        %1447 = vmatpush1.msra.mxu0 0.0
        %1448 = vmatprep.subr.mxu0 0.0
        %1449 = vmatpush1.msra.mxu0 0.0
        %1450 = vmatprep.subr.mxu0 0.0
        %1451 = vmatpush1.msra.mxu0 0.0
        %1452 = vmatprep.subr.mxu0 0.0
        %1453 = vmatpush1.msra.mxu0 0.0
        %1454 = vmatprep.subr.mxu0 0.0
        %1455 = vmatpush1.msra.mxu0 0.0
        %1456 = vmatprep.subr.mxu0 0.0
        %1457 = vmatpush1.msra.mxu0 0.0
        %1458 = vmatprep.subr.mxu0 0.0
        %1459 = vmatpush1.msra.mxu0 0.0
        %1460 = vmatprep.subr.mxu0 0.0
        %1461 = vmatpush1.msra.mxu0 0.0
        %1462 = vmatprep.subr.mxu0 0.0
        %1463 = vmatpush1.msra.mxu0 0.0
        %1464 = vmatprep.subr.mxu0 0.0
        %1465 = vmatpush1.msra.mxu0 0.0
        %1466 = vmatprep.subr.mxu0 0.0
        %1467 = vmatpush1.msra.mxu0 0.0
        %1468 = vmatprep.subr.mxu0 0.0
        %1469 = vmatpush1.msra.mxu0 0.0
        %1470 = vmatprep.subr.mxu0 0.0
        %1471 = vmatpush1.msra.mxu0 0.0
        %1472 = vmatprep.subr.mxu0 0.0
        %1473 = vmatpush1.msra.mxu0 0.0
        %1474 = vmatprep.subr.mxu0 0.0
        %1475 = vmatpush1.msra.mxu0 0.0
        %1476 = vmatprep.subr.mxu0 0.0
        %1477 = vmatpush1.msra.mxu0 0.0
        %1478 = vmatprep.subr.mxu0 0.0
        %1479 = vmatpush1.msra.mxu0 0.0
        %1480 = vmatprep.subr.mxu0 0.0
        %1481 = vmatpush1.msra.mxu0 0.0
        %1482 = vmatprep.subr.mxu0 0.0
        %1483 = vmatpush1.msra.mxu0 0.0
        %1484 = vmatprep.subr.mxu0 0.0
        %1485 = vmatpush1.msra.mxu0 0.0
        %1486 = vmatprep.subr.mxu0 0.0
        %1487 = vmatpush1.msra.mxu0 0.0
        %1488 = vmatprep.subr.mxu0 0.0
        %1489 = vmatpush1.msra.mxu0 0.0
        %1490 = vmatprep.subr.mxu0 0.0
        %1491 = vmatpush1.msra.mxu0 0.0
        %1492 = vmatprep.subr.mxu0 0.0
        %1493 = vmatpush1.msra.mxu0 0.0
        %1494 = vmatprep.subr.mxu0 0.0
        %1495 = vmatpush1.msra.mxu0 0.0
        %1496 = vmatprep.subr.mxu0 0.0
        %1497 = vmatpush1.msra.mxu0 0.0
        %1498 = vmatprep.subr.mxu0 0.0
        %1499 = vmatpush1.msra.mxu0 0.0
        %1500 = vmatprep.subr.mxu0 0.0
        %1501 = vmatpush1.msra.mxu0 0.0
        %1502 = vmatprep.subr.mxu0 0.0
        %1503 = vmatpush1.msra.mxu0 0.0
        %1504 = vmatprep.mubr.f32.mxu0 0.0
        %1505 = vmatmul.mubr.f32.gmra.mrb[0].mxu0 %v1438
        %v1506 = vpop.f32.mrb[0].mxu0
        %v1507 = vadd.f32 0.0, %v1506
        %v1508 = vpop.f32.mrb[0].mxu0
        %1509 = vdwg.mxu0
        %1510 = vrot.lane.b32.xlu0 %v535, 112
        %v1511 = vpop.permute.xlu0 %1510
        %1512 = vrot.lane.b32.xlu0 %v536, 112
        %v1513 = vpop.permute.xlu0 %1512
        %1514 = vrot.lane.b32.xlu0 %v537, 112
        %v1515 = vpop.permute.xlu0 %1514
        %1516 = vrot.lane.b32.xlu0 %v538, 112
        %v1517 = vpop.permute.xlu0 %1516
        %v1519 = vsel %vm807, %v1507, 0
        %v1521 = vsel %vm807, %v1511, 0
        %v1523 = vsel %vm807, %v1513, 0
        %v1525 = vsel %vm807, %v1515, 0
        %v1527 = vsel %vm807, %v1517, 0
        %1529 = vmatprep.subr.mxu0 0.0
        %1530 = vmatpush1.xpose.msra.mxu0 %v1521
        %1531 = vmatprep.subr.mxu0 0.0
        %1532 = vmatpush1.xpose.msra.mxu0 %v1523
        %1533 = vmatprep.subr.mxu0 0.0
        %1534 = vmatpush1.xpose.msra.mxu0 %v1525
        %1535 = vmatprep.subr.mxu0 0.0
        %1536 = vmatpush1.xpose.msra.mxu0 %v1527
        %1537 = vmatprep.subr.mxu0 0.0
        %1538 = vmatpush1.xpose.msra.mxu0 0.0
        %1539 = vmatprep.subr.mxu0 0.0
        %1540 = vmatpush1.xpose.msra.mxu0 0.0
        %1541 = vmatprep.subr.mxu0 0.0
        %1542 = vmatpush1.xpose.msra.mxu0 0.0
        %1543 = vmatprep.subr.mxu0 0.0
        %1544 = vmatpush1.xpose.msra.mxu0 0.0
        %1545 = vmatprep.subr.mxu0 0.0
        %1546 = vmatpush1.xpose.msra.mxu0 0.0
        %1547 = vmatprep.subr.mxu0 0.0
        %1548 = vmatpush1.xpose.msra.mxu0 0.0
        %1549 = vmatprep.subr.mxu0 0.0
        %1550 = vmatpush1.xpose.msra.mxu0 0.0
        %1551 = vmatprep.subr.mxu0 0.0
        %1552 = vmatpush1.xpose.msra.mxu0 0.0
        %1553 = vmatprep.subr.mxu0 0.0
        %1554 = vmatpush1.xpose.msra.mxu0 0.0
        %1555 = vmatprep.subr.mxu0 0.0
        %1556 = vmatpush1.xpose.msra.mxu0 0.0
        %1557 = vmatprep.subr.mxu0 0.0
        %1558 = vmatpush1.xpose.msra.mxu0 0.0
        %1559 = vmatprep.subr.mxu0 0.0
        %1560 = vmatpush1.xpose.msra.mxu0 0.0
        %1561 = vmatprep.subr.mxu0 0.0
        %1562 = vmatpush1.xpose.msra.mxu0 0.0
        %1563 = vmatprep.subr.mxu0 0.0
        %1564 = vmatpush1.xpose.msra.mxu0 0.0
        %1565 = vmatprep.subr.mxu0 0.0
        %1566 = vmatpush1.xpose.msra.mxu0 0.0
        %1567 = vmatprep.subr.mxu0 0.0
        %1568 = vmatpush1.xpose.msra.mxu0 0.0
        %1569 = vmatprep.subr.mxu0 0.0
        %1570 = vmatpush1.xpose.msra.mxu0 0.0
        %1571 = vmatprep.subr.mxu0 0.0
        %1572 = vmatpush1.xpose.msra.mxu0 0.0
        %1573 = vmatprep.subr.mxu0 0.0
        %1574 = vmatpush1.xpose.msra.mxu0 0.0
        %1575 = vmatprep.subr.mxu0 0.0
        %1576 = vmatpush1.xpose.msra.mxu0 0.0
        %1577 = vmatprep.subr.mxu0 0.0
        %1578 = vmatpush1.xpose.msra.mxu0 0.0
        %1579 = vmatprep.subr.mxu0 0.0
        %1580 = vmatpush1.xpose.msra.mxu0 0.0
        %1581 = vmatprep.subr.mxu0 0.0
        %1582 = vmatpush1.xpose.msra.mxu0 0.0
        %1583 = vmatprep.subr.mxu0 0.0
        %1584 = vmatpush1.xpose.msra.mxu0 0.0
        %1585 = vmatprep.subr.mxu0 0.0
        %1586 = vmatpush1.xpose.msra.mxu0 0.0
        %1587 = vmatprep.subr.mxu0 0.0
        %1588 = vmatpush1.xpose.msra.mxu0 0.0
        %1589 = vmatprep.subr.mxu0 0.0
        %1590 = vmatpush1.xpose.msra.mxu0 0.0
        %1591 = vmatprep.subr.mxu0 0.0
        %1592 = vmatpush1.xpose.msra.mxu0 0.0
        %1593 = vmatprep.mubr.f32.mxu0 0.0
        %1594 = vmatmul.mubr.f32.gmra.mrb[0].mxu0 %v1519
        %v1595 = vpop.f32.mrb[0].mxu0
        %v1596 = vadd.f32 0.0, %v1595
        %v1597 = vpop.f32.mrb[0].mxu0
        %1598 = vdwg.mxu0
        %v1599 = vadd.f32 %v1332, %v1596
        %1600 = vrot.lane.b32.xlu0 %v626, 104
        %v1601 = vpop.permute.xlu0 %1600
        %1602 = vrot.lane.b32.xlu0 %v715, 104
        %v1603 = vpop.permute.xlu0 %1602
        %v1604 = vsel %vm807, %v1601, 0
        %v1606 = vsel %vm807, %v1603, 0
        %1608 = vmatprep.subr.mxu0 0.0
        %1609 = vmatpush1.xpose.msra.mxu0 %v1606
        %1610 = vmatprep.subr.mxu0 0.0
        %1611 = vmatpush1.xpose.msra.mxu0 0.0
        %1612 = vmatprep.subr.mxu0 0.0
        %1613 = vmatpush1.xpose.msra.mxu0 0.0
        %1614 = vmatprep.subr.mxu0 0.0
        %1615 = vmatpush1.xpose.msra.mxu0 0.0
        %1616 = vmatprep.subr.mxu0 0.0
        %1617 = vmatpush1.xpose.msra.mxu0 0.0
        %1618 = vmatprep.subr.mxu0 0.0
        %1619 = vmatpush1.xpose.msra.mxu0 0.0
        %1620 = vmatprep.subr.mxu0 0.0
        %1621 = vmatpush1.xpose.msra.mxu0 0.0
        %1622 = vmatprep.subr.mxu0 0.0
        %1623 = vmatpush1.xpose.msra.mxu0 0.0
        %1624 = vmatprep.subr.mxu0 0.0
        %1625 = vmatpush1.xpose.msra.mxu0 0.0
        %1626 = vmatprep.subr.mxu0 0.0
        %1627 = vmatpush1.xpose.msra.mxu0 0.0
        %1628 = vmatprep.subr.mxu0 0.0
        %1629 = vmatpush1.xpose.msra.mxu0 0.0
        %1630 = vmatprep.subr.mxu0 0.0
        %1631 = vmatpush1.xpose.msra.mxu0 0.0
        %1632 = vmatprep.subr.mxu0 0.0
        %1633 = vmatpush1.xpose.msra.mxu0 0.0
        %1634 = vmatprep.subr.mxu0 0.0
        %1635 = vmatpush1.xpose.msra.mxu0 0.0
        %1636 = vmatprep.subr.mxu0 0.0
        %1637 = vmatpush1.xpose.msra.mxu0 0.0
        %1638 = vmatprep.subr.mxu0 0.0
        %1639 = vmatpush1.xpose.msra.mxu0 0.0
        %1640 = vmatprep.subr.mxu0 0.0
        %1641 = vmatpush1.xpose.msra.mxu0 0.0
        %1642 = vmatprep.subr.mxu0 0.0
        %1643 = vmatpush1.xpose.msra.mxu0 0.0
        %1644 = vmatprep.subr.mxu0 0.0
        %1645 = vmatpush1.xpose.msra.mxu0 0.0
        %1646 = vmatprep.subr.mxu0 0.0
        %1647 = vmatpush1.xpose.msra.mxu0 0.0
        %1648 = vmatprep.subr.mxu0 0.0
        %1649 = vmatpush1.xpose.msra.mxu0 0.0
        %1650 = vmatprep.subr.mxu0 0.0
        %1651 = vmatpush1.xpose.msra.mxu0 0.0
        %1652 = vmatprep.subr.mxu0 0.0
        %1653 = vmatpush1.xpose.msra.mxu0 0.0
        %1654 = vmatprep.subr.mxu0 0.0
        %1655 = vmatpush1.xpose.msra.mxu0 0.0
        %1656 = vmatprep.subr.mxu0 0.0
        %1657 = vmatpush1.xpose.msra.mxu0 0.0
        %1658 = vmatprep.subr.mxu0 0.0
        %1659 = vmatpush1.xpose.msra.mxu0 0.0
        %1660 = vmatprep.subr.mxu0 0.0
        %1661 = vmatpush1.xpose.msra.mxu0 0.0
        %1662 = vmatprep.subr.mxu0 0.0
        %1663 = vmatpush1.xpose.msra.mxu0 0.0
        %1664 = vmatprep.subr.mxu0 0.0
        %1665 = vmatpush1.xpose.msra.mxu0 0.0
        %1666 = vmatprep.subr.mxu0 0.0
        %1667 = vmatpush1.xpose.msra.mxu0 0.0
        %1668 = vmatprep.subr.mxu0 0.0
        %1669 = vmatpush1.xpose.msra.mxu0 0.0
        %1670 = vmatprep.subr.mxu0 0.0
        %1671 = vmatpush1.xpose.msra.mxu0 0.0
        %1672 = vmatprep.mubr.f32.mxu0 0.0
        %1673 = vmatmul.mubr.f32.gmra.mrb[0].mxu0 %v1604
        %v1674 = vpop.f32.mrb[0].mxu0
        %v1675 = vadd.f32 0.0, %v1674
        %v1676 = vpop.f32.mrb[0].mxu0
        %1677 = vdwg.mxu0
        %v1678 = vmul.f32 %v1675, 0.35355338
        %v1679 = vadd.f32 %v1678, %v534
        %s1680 = scalar_lea.vmem %s527, 24 [#allocation17]
        %1681 = vst.msk [vmem:[%s1680] sm:$0xff] %vm807, %v1679
        %v1682 = vsel %vm807, %v1679, -inf
        %v1683 = vrot.slane %v1682, 4
        %v1684 = vmax.f32 %v1682, %v1683
        %v1685 = vrot.slane %v1684, 2
        %v1686 = vmax.f32 %v1684, %v1685
        %v1687 = vrot.slane %v1686, 1
        %v1688 = vmax.f32 %v1686, %v1687
        %v1689 = vsub.f32 %v1679, %v1688
        %v1690 = vmul.f32 %v1689, 1.442695
        %v1691 = vpow.pop %v1690
        %v1692 = vsel %vm807, %v1691, 0.0
        %v1693 = vrot.slane %v1692, 4
        %v1694 = vadd.f32 %v1692, %v1693
        %v1695 = vrot.slane %v1694, 2
        %v1696 = vadd.f32 %v1694, %v1695
        %v1697 = vrot.slane %v1696, 1
        %v1698 = vadd.f32 %v1696, %v1697
        %v1699 = vrcp.pop %v1698
        %v1700 = vmul.f32 %v1691, %v1699
        %1701 = vrot.lane.b32.xlu0 %v804, 104
        %v1702 = vpop.permute.xlu0 %1701
        %v1705 = vsel %vm807, %v1700, 0
        %1707 = vmatprep.subr.mxu0 0.0
        %1708 = vmatpush1.msra.mxu0 %v1702
        %1709 = vmatprep.subr.mxu0 0.0
        %1710 = vmatpush1.msra.mxu0 0.0
        %1711 = vmatprep.subr.mxu0 0.0
        %1712 = vmatpush1.msra.mxu0 0.0
        %1713 = vmatprep.subr.mxu0 0.0
        %1714 = vmatpush1.msra.mxu0 0.0
        %1715 = vmatprep.subr.mxu0 0.0
        %1716 = vmatpush1.msra.mxu0 0.0
        %1717 = vmatprep.subr.mxu0 0.0
        %1718 = vmatpush1.msra.mxu0 0.0
        %1719 = vmatprep.subr.mxu0 0.0
        %1720 = vmatpush1.msra.mxu0 0.0
        %1721 = vmatprep.subr.mxu0 0.0
        %1722 = vmatpush1.msra.mxu0 0.0
        %1723 = vmatprep.subr.mxu0 0.0
        %1724 = vmatpush1.msra.mxu0 0.0
        %1725 = vmatprep.subr.mxu0 0.0
        %1726 = vmatpush1.msra.mxu0 0.0
        %1727 = vmatprep.subr.mxu0 0.0
        %1728 = vmatpush1.msra.mxu0 0.0
        %1729 = vmatprep.subr.mxu0 0.0
        %1730 = vmatpush1.msra.mxu0 0.0
        %1731 = vmatprep.subr.mxu0 0.0
        %1732 = vmatpush1.msra.mxu0 0.0
        %1733 = vmatprep.subr.mxu0 0.0
        %1734 = vmatpush1.msra.mxu0 0.0
        %1735 = vmatprep.subr.mxu0 0.0
        %1736 = vmatpush1.msra.mxu0 0.0
        %1737 = vmatprep.subr.mxu0 0.0
        %1738 = vmatpush1.msra.mxu0 0.0
        %1739 = vmatprep.subr.mxu0 0.0
        %1740 = vmatpush1.msra.mxu0 0.0
        %1741 = vmatprep.subr.mxu0 0.0
        %1742 = vmatpush1.msra.mxu0 0.0
        %1743 = vmatprep.subr.mxu0 0.0
        %1744 = vmatpush1.msra.mxu0 0.0
        %1745 = vmatprep.subr.mxu0 0.0
        %1746 = vmatpush1.msra.mxu0 0.0
        %1747 = vmatprep.subr.mxu0 0.0
        %1748 = vmatpush1.msra.mxu0 0.0
        %1749 = vmatprep.subr.mxu0 0.0
        %1750 = vmatpush1.msra.mxu0 0.0
        %1751 = vmatprep.subr.mxu0 0.0
        %1752 = vmatpush1.msra.mxu0 0.0
        %1753 = vmatprep.subr.mxu0 0.0
        %1754 = vmatpush1.msra.mxu0 0.0
        %1755 = vmatprep.subr.mxu0 0.0
        %1756 = vmatpush1.msra.mxu0 0.0
        %1757 = vmatprep.subr.mxu0 0.0
        %1758 = vmatpush1.msra.mxu0 0.0
        %1759 = vmatprep.subr.mxu0 0.0
        %1760 = vmatpush1.msra.mxu0 0.0
        %1761 = vmatprep.subr.mxu0 0.0
        %1762 = vmatpush1.msra.mxu0 0.0
        %1763 = vmatprep.subr.mxu0 0.0
        %1764 = vmatpush1.msra.mxu0 0.0
        %1765 = vmatprep.subr.mxu0 0.0
        %1766 = vmatpush1.msra.mxu0 0.0
        %1767 = vmatprep.subr.mxu0 0.0
        %1768 = vmatpush1.msra.mxu0 0.0
        %1769 = vmatprep.subr.mxu0 0.0
        %1770 = vmatpush1.msra.mxu0 0.0
        %1771 = vmatprep.mubr.f32.mxu0 0.0
        %1772 = vmatmul.mubr.f32.gmra.mrb[0].mxu0 %v1705
        %v1773 = vpop.f32.mrb[0].mxu0
        %v1774 = vadd.f32 0.0, %v1773
        %v1775 = vpop.f32.mrb[0].mxu0
        %1776 = vdwg.mxu0
        %1777 = vrot.lane.b32.xlu0 %v535, 104
        %v1778 = vpop.permute.xlu0 %1777
        %1779 = vrot.lane.b32.xlu0 %v536, 104
        %v1780 = vpop.permute.xlu0 %1779
        %1781 = vrot.lane.b32.xlu0 %v537, 104
        %v1782 = vpop.permute.xlu0 %1781
        %1783 = vrot.lane.b32.xlu0 %v538, 104
        %v1784 = vpop.permute.xlu0 %1783
        %v1786 = vsel %vm807, %v1774, 0
        %v1788 = vsel %vm807, %v1778, 0
        %v1790 = vsel %vm807, %v1780, 0
        %v1792 = vsel %vm807, %v1782, 0
        %v1794 = vsel %vm807, %v1784, 0
        %1796 = vmatprep.subr.mxu0 0.0
        %1797 = vmatpush1.xpose.msra.mxu0 %v1788
        %1798 = vmatprep.subr.mxu0 0.0
        %1799 = vmatpush1.xpose.msra.mxu0 %v1790
        %1800 = vmatprep.subr.mxu0 0.0
        %1801 = vmatpush1.xpose.msra.mxu0 %v1792
        %1802 = vmatprep.subr.mxu0 0.0
        %1803 = vmatpush1.xpose.msra.mxu0 %v1794
        %1804 = vmatprep.subr.mxu0 0.0
        %1805 = vmatpush1.xpose.msra.mxu0 0.0
        %1806 = vmatprep.subr.mxu0 0.0
        %1807 = vmatpush1.xpose.msra.mxu0 0.0
        %1808 = vmatprep.subr.mxu0 0.0
        %1809 = vmatpush1.xpose.msra.mxu0 0.0
        %1810 = vmatprep.subr.mxu0 0.0
        %1811 = vmatpush1.xpose.msra.mxu0 0.0
        %1812 = vmatprep.subr.mxu0 0.0
        %1813 = vmatpush1.xpose.msra.mxu0 0.0
        %1814 = vmatprep.subr.mxu0 0.0
        %1815 = vmatpush1.xpose.msra.mxu0 0.0
        %1816 = vmatprep.subr.mxu0 0.0
        %1817 = vmatpush1.xpose.msra.mxu0 0.0
        %1818 = vmatprep.subr.mxu0 0.0
        %1819 = vmatpush1.xpose.msra.mxu0 0.0
        %1820 = vmatprep.subr.mxu0 0.0
        %1821 = vmatpush1.xpose.msra.mxu0 0.0
        %1822 = vmatprep.subr.mxu0 0.0
        %1823 = vmatpush1.xpose.msra.mxu0 0.0
        %1824 = vmatprep.subr.mxu0 0.0
        %1825 = vmatpush1.xpose.msra.mxu0 0.0
        %1826 = vmatprep.subr.mxu0 0.0
        %1827 = vmatpush1.xpose.msra.mxu0 0.0
        %1828 = vmatprep.subr.mxu0 0.0
        %1829 = vmatpush1.xpose.msra.mxu0 0.0
        %1830 = vmatprep.subr.mxu0 0.0
        %1831 = vmatpush1.xpose.msra.mxu0 0.0
        %1832 = vmatprep.subr.mxu0 0.0
        %1833 = vmatpush1.xpose.msra.mxu0 0.0
        %1834 = vmatprep.subr.mxu0 0.0
        %1835 = vmatpush1.xpose.msra.mxu0 0.0
        %1836 = vmatprep.subr.mxu0 0.0
        %1837 = vmatpush1.xpose.msra.mxu0 0.0
        %1838 = vmatprep.subr.mxu0 0.0
        %1839 = vmatpush1.xpose.msra.mxu0 0.0
        %1840 = vmatprep.subr.mxu0 0.0
        %1841 = vmatpush1.xpose.msra.mxu0 0.0
        %1842 = vmatprep.subr.mxu0 0.0
        %1843 = vmatpush1.xpose.msra.mxu0 0.0
        %1844 = vmatprep.subr.mxu0 0.0
        %1845 = vmatpush1.xpose.msra.mxu0 0.0
        %1846 = vmatprep.subr.mxu0 0.0
        %1847 = vmatpush1.xpose.msra.mxu0 0.0
        %1848 = vmatprep.subr.mxu0 0.0
        %1849 = vmatpush1.xpose.msra.mxu0 0.0
        %1850 = vmatprep.subr.mxu0 0.0
        %1851 = vmatpush1.xpose.msra.mxu0 0.0
        %1852 = vmatprep.subr.mxu0 0.0
        %1853 = vmatpush1.xpose.msra.mxu0 0.0
        %1854 = vmatprep.subr.mxu0 0.0
        %1855 = vmatpush1.xpose.msra.mxu0 0.0
        %1856 = vmatprep.subr.mxu0 0.0
        %1857 = vmatpush1.xpose.msra.mxu0 0.0
        %1858 = vmatprep.subr.mxu0 0.0
        %1859 = vmatpush1.xpose.msra.mxu0 0.0
        %1860 = vmatprep.mubr.f32.mxu0 0.0
        %1861 = vmatmul.mubr.f32.gmra.mrb[0].mxu0 %v1786
        %v1862 = vpop.f32.mrb[0].mxu0
        %v1863 = vadd.f32 0.0, %v1862
        %v1864 = vpop.f32.mrb[0].mxu0
        %1865 = vdwg.mxu0
        %v1866 = vadd.f32 %v1599, %v1863
        %v1867 = vsel %vm543, %v1866, 0.0
        %1868 = vadd.xlane.f32.xlu0 %v1867
        %v1869 = vpop.xlane.xlu0 %1868
        %v1870 = vrcp.pop 32.0
        %v1871 = vmul.f32 %v1869, %v1870
        %v1872 = vsub.f32 %v1866, %v1871
        %v1873 = vmul.f32 %v1872, %v1872
        %v1874 = vsel %vm543, %v1873, 0.0
        %1875 = vadd.xlane.f32.xlu0 %v1874
        %v1876 = vpop.xlane.xlu0 %1875
        %v1877 = vmul.f32 %v1876, %v1870
        %v1878 = vadd.f32 %v1877, 1e-05
        %v1879 = vrsqrt.pop %v1878
        %v1880 = vmul.f32 %v1872, %v1879
        %1881 = vst.msk [vmem:[%s520] sm:$0xff] %vm543, %v1880
        %s1882 = sand.u32 %s234, 1
        %s1883 = scalar_lea.sflag [#allocation4], %s1882
        %s1884 = sand.u32 %s234, 1
        %s1885 = smul.addr %s1884, 8
        %s1886 = scalar_lea.vmem [#allocation16], %s1885
        %s1887 = sand.u32 %s260, 1
        %s1888 = scalar_lea.sflag [#allocation18], %s1887
        %s1889 = sand.u32 %s260, 1
        %s1890 = smul.addr %s1889, 32
        %s1891 = scalar_lea.vmem [#allocation17], %s1890
        // Predicated region
        $region85: #{tpu_custom_call.1} parent=51 // pred_check
          %p1892 = pneg %p244
        $region86: #{tpu_custom_call.1} parent=51 // pred_check_branch
          %1894 = sbr.rel (%p1892) target = $region88
        $region87: #{tpu_custom_call.1} parent=51 // pred_region
          %s1896 = ssub.s32 128, 128
          %1897 = vsyncadd %s1883, %s1896
          %s1898 = smul.addr %s38, 128
          %s1899 = scalar_lea.hbm %s8, %s1898
          %s1901 = sshll.u32 %s1886, 4
          %s1902 = int_to_ptr.vmem [resolvable:$true] %s1901
          %1904 = dma.vmem_to_hbm [thread:$0]  %s1902, 128, %s1899, %s1883
        $region88: #{tpu_custom_call.1} parent=51 // pred_fallthru
          _
        // Predicated region
        $region89: #{tpu_custom_call.1} parent=51 // pred_check
          %p1905 = pneg %p270
        $region90: #{tpu_custom_call.1} parent=51 // pred_check_branch
          %1907 = sbr.rel (%p1905) target = $region92
        $region91: #{tpu_custom_call.1} parent=51 // pred_region
          %s1909 = ssub.s32 512, 512
          %1910 = vsyncadd %s1888, %s1909
          %s1911 = smul.addr %s38, 4
          %s1912 = smul.addr %s1911, 128
          %s1913 = scalar_lea.hbm %s9, %s1912
          %s1914 = sshll.u32 %s1891, 4
          %s1915 = int_to_ptr.vmem [resolvable:$true] %s1914
          %1920 = dma.vmem_to_hbm [thread:$0]  %s1915, 512, %s1913, %s1888, 128, 128, 8
        $region92: #{tpu_custom_call.1} parent=51 // pred_fallthru
          _
      $region52: #{tpu_custom_call.1} parent=5 // pred_fallthru
        _
      %p1921 = scmp.le.s32.totalorder 2, %s33
      // Predicated region
      $region93: #{tpu_custom_call.1} parent=5 // pred_check
        %p1922 = pneg %p1921
      $region94: #{tpu_custom_call.1} parent=5 // pred_check_branch
        %1924 = sbr.rel (%p1922) target = $region96
      $region95: #{tpu_custom_call.1} parent=5 // pred_region
        %s1925 = ssub.s32 %s33, 2
        // Predicated region
        $region97: #{tpu_custom_call.1} parent=95 // pred_check
          %p1926 = pneg %p250
        $region98: #{tpu_custom_call.1} parent=95 // pred_check_branch
          %1928 = sbr.rel (%p1926) target = $region100
        $region99: #{tpu_custom_call.1} parent=95 // pred_region
          %s1929 = sand.u32 %s235, 1
          %s1930 = scalar_lea.sflag [#allocation4], %s1929
          %s1931 = sand.u32 %s235, 1
          %s1932 = smul.addr %s1931, 8
          %s1933 = scalar_lea.vmem [#allocation16], %s1932
          %1934 = dma.done %s1930, 128
        $region100: #{tpu_custom_call.1} parent=95 // pred_fallthru
          _
        // Predicated region
        $region101: #{tpu_custom_call.1} parent=95 // pred_check
          %p1935 = pneg %p276
        $region102: #{tpu_custom_call.1} parent=95 // pred_check_branch
          %1937 = sbr.rel (%p1935) target = $region104
        $region103: #{tpu_custom_call.1} parent=95 // pred_region
          %s1938 = sand.u32 %s261, 1
          %s1939 = scalar_lea.sflag [#allocation18], %s1938
          %s1940 = sand.u32 %s261, 1
          %s1941 = smul.addr %s1940, 32
          %s1942 = scalar_lea.vmem [#allocation17], %s1941
          %1943 = dma.done %s1939, 512
        $region104: #{tpu_custom_call.1} parent=95 // pred_fallthru
          _
      $region96: #{tpu_custom_call.1} parent=5 // pred_fallthru
        _
    $region6: #{tpu_custom_call.1} parent=1 // loop_footer
      %s37 = sadd.s32 1, %s33
    $region7: #{tpu_custom_call.1} parent=1 // loop_footer_branch
      %32 = sbr.rel target = $region3
    $region8: #{tpu_custom_call.1} parent=1 // loop_exit
      _
    %1944 = vsyncpa [#allocation3], 1
    %s1945 = scalar_lea.sflag [#allocation3], 1
    %1946 = vsyncpa %s1945, 1
    %1947 = vsyncpa [#allocation6], 1
    %s1948 = scalar_lea.sflag [#allocation6], 1
    %1949 = vsyncpa %s1948, 1
    %1950 = vsyncpa [#allocation9], 1
    %s1951 = scalar_lea.sflag [#allocation9], 1
    %1952 = vsyncpa %s1951, 1
    %1953 = vsyncpa [#allocation12], 1
    %1954 = vsyncpa [#allocation15], 1
    %1955 = vsyncpa [#allocation4], 1
    %s1956 = scalar_lea.sflag [#allocation4], 1
    %1957 = vsyncpa %s1956, 1
    %1958 = vsyncpa [#allocation18], 1
    %s1959 = scalar_lea.sflag [#allocation18], 1
    %1960 = vsyncpa %s1959, 1

</llo_original>
